<compile_context>
chip_gen: v7x
topology: tpu7x:2x2x1
jax: 0.10.0
libtpu: 0.0.40
codegen_flags: <defaults>
</compile_context>

<pallas_src>
import functools
import math

import jax
import jax.numpy as jnp
import numpy as np
from jax.experimental import pallas as pl
from jax.experimental.pallas import tpu as pltpu

N_WAY = 5          # hard-coded "5-way" few-shot structure in the reference code
LN_EPS = 1e-6


def _layer_norm(x, gamma, beta):
    mean = jnp.mean(x, axis=-1, keepdims=True)
    var = jnp.mean((x - mean) ** 2, axis=-1, keepdims=True)
    return (x - mean) * jax.lax.rsqrt(var + LN_EPS) * gamma + beta


def mha_kernel(a_ref, e_ref, q_ref, k_ref, v_ref,
               wq_ref, wkv_ref, wfc_ref, ln_ref,
               out_ref, *, lk, d):
    # Per-batch-element tile: seq refs carry a leading block dim of 1.
    q = q_ref[0]            # (Lq, D)
    k = k_ref[0]            # (Lk, D)
    v = v_ref[0]            # (Lk, D)

    # --- fused K/V projection: one wide MXU matmul ------------------------
    # rows 0:Lk are k, rows Lk:2Lk are v; columns 0:D are Wk, D:2D are Wv.
    kv = jnp.concatenate([k, v], axis=0)                                   # (2Lk, D), 8-row aligned
    kvp = jnp.dot(kv, wkv_ref[...], preferred_element_type=jnp.float32)    # (2Lk, 2D)
    kp = kvp[0:lk, 0:d]                                                    # k @ Wk
    vp = kvp[lk:2 * lk, d:2 * d]                                           # v @ Wv

    # --- shot-averaged, pre-scaled Q --------------------------------------
    # a_ref already contains 1/(n_shot_q * temperature); averaging commutes
    # with the linear projection, so average first (5 rows instead of Lq).
    q_avg = jnp.dot(a_ref[...], q, preferred_element_type=jnp.float32)     # (5, D)
    qp_avg = jnp.dot(q_avg, wq_ref[...], preferred_element_type=jnp.float32)  # (5, D)

    # --- attention over keys (softmax over Lk) ----------------------------
    logits = jax.lax.dot_general(qp_avg, kp, (((1,), (1,)), ((), ())),
                                 preferred_element_type=jnp.float32)       # (5, Lk)
    m = jnp.max(logits, axis=-1, keepdims=True)
    ex = jnp.exp(logits - m)
    p = ex * pl.reciprocal(jnp.sum(ex, axis=-1, keepdims=True), approx=True)
    proto = jnp.dot(p, vp, preferred_element_type=jnp.float32)             # (5, D)

    # expand prototypes back to (Lk, D): row (shot*5 + way) = proto[way],
    # expressed as a one-hot matmul on the MXU (no unaligned concats).
    expanded = jnp.dot(e_ref[...], proto, preferred_element_type=jnp.float32)  # (Lk, D)

    # --- residual / LN / fc / leaky-relu / residual / LN -------------------
    ln = ln_ref[...]                       # (4, D): [g1; b1; g2; b2], read once
    g1, b1 = ln[0:1, :], ln[1:2, :]
    g2, b2 = ln[2:3, :], ln[3:4, :]

    out = expanded + kp
    out = _layer_norm(out, g1, b1)
    residual = out
    fc = jnp.dot(out, wfc_ref[...], preferred_element_type=jnp.float32)
    act = jnp.where(fc >= 0, fc, 0.1 * fc)            # LeakyReLU(0.1)
    out = _layer_norm(act + residual, g2, b2)

    out_ref[0] = out.astype(out_ref.dtype)


def multi_head_attention(q, k, v, params, *, d_k):
    B, Lq, D = q.shape
    _, Lk, Dk = k.shape
    _, Lv, Dv = v.shape
    assert D == Dk == Dv
    assert Lq % N_WAY == 0 and Lk % N_WAY == 0 and Lk == Lv
    assert params["wq"].shape == (D, D) and params["wfc"].shape == (D, D)
    n_shot_q = Lq // N_WAY
    temperature = float(np.power(d_k, 0.5))

    # Constant matrices, built once on host.
    #   A[w, s*5 + w] = 1 / (n_shot_q * temperature)   -> averaging + scaling
    #   E[s*5 + w, w] = 1                              -> prototype expansion
    a_mat = np.zeros((N_WAY, Lq), np.float32)
    a_mat[np.arange(Lq) % N_WAY, np.arange(Lq)] = 1.0 / (n_shot_q * temperature)
    e_mat = np.zeros((Lk, N_WAY), np.float32)
    e_mat[np.arange(Lk), np.arange(Lk) % N_WAY] = 1.0
    a_mat = jnp.asarray(a_mat)
    e_mat = jnp.asarray(e_mat)

    # Fused K/V projection weight and packed LayerNorm params.
    wkv = jnp.concatenate([params["wk"], params["wv"]], axis=1)            # (D, 2D)
    ln_pack = jnp.concatenate(
        [params["g1"], params["b1"], params["g2"], params["b2"]], axis=0)  # (4, D)

    kernel = functools.partial(mha_kernel, lk=Lk, d=D)

    seq_spec = lambda L: pl.BlockSpec((1, L, D), lambda b: (b, 0, 0))
    const_spec = lambda shape: pl.BlockSpec(shape, lambda b: (0, 0))

    return pl.pallas_call(
        kernel,
        out_shape=jax.ShapeDtypeStruct((B, Lk, D), q.dtype),
        grid=(B,),
        in_specs=[
            const_spec((N_WAY, Lq)),     # A (scaled averaging matrix)
            const_spec((Lk, N_WAY)),     # E (one-hot expansion matrix)
            seq_spec(Lq),                # q
            seq_spec(Lk),                # k
            seq_spec(Lk),                # v
            const_spec((D, D)),          # Wq
            const_spec((D, 2 * D)),      # [Wk | Wv]
            const_spec((D, D)),          # Wfc
            const_spec((4, D)),          # [g1; b1; g2; b2]
        ],
        out_specs=seq_spec(Lk),
        compiler_params=pltpu.CompilerParams(dimension_semantics=("parallel",)),
    )(a_mat, e_mat, q, k, v, params["wq"], wkv, params["wfc"], ln_pack)


def reference(q, k, v, params, *, d_k):
    """Pure-JAX re-implementation of the PyTorch forward (eval mode)."""
    temperature = float(np.power(d_k, 0.5))
    qp = q @ params["wq"]
    kp = k @ params["wk"]
    vp = v @ params["wv"]
    attn = jnp.einsum("bqd,bkd->bqk", qp, kp) / temperature
    B, Lq, Lk = attn.shape
    attn_avg = attn.reshape(B, Lq // N_WAY, N_WAY, Lk).mean(axis=1)
    p = jax.nn.softmax(attn_avg, axis=-1)
    proto = p @ vp
    expanded = jnp.tile(proto, (1, Lk // N_WAY, 1))
    out = expanded + kp
    out = _layer_norm(out, params["g1"][0], params["b1"][0])
    residual = out
    fc = out @ params["wfc"]
    act = jnp.where(fc >= 0, fc, 0.1 * fc)
    out = _layer_norm(act + residual, params["g2"][0], params["b2"][0])
    return out


if __name__ == "__main__":
    # Module hyper-params (the forward only type-checks with n_head=1,
    # d_k == d_v == d_model, sequence length divisible by 5).
    n_head, d_model, d_k, d_v = 1, 128, 128, 128
    B, L = 2, 40  # 5-way x 8-shot

    key = jax.random.PRNGKey(0)
    kq, kk, kv, kfc, kg, kb, kxq, kxk, kxv = jax.random.split(key, 9)

    std_qk = math.sqrt(2.0 / (d_model + d_k))
    std_v = math.sqrt(2.0 / (d_model + d_v))
    std_fc = math.sqrt(2.0 / (n_head * d_model + d_model))  # xavier_normal_

    params = {
        "wq": (std_qk * jax.random.normal(kq, (d_model, n_head * d_k))).astype(jnp.float32),
        "wk": (std_qk * jax.random.normal(kk, (d_model, n_head * d_k))).astype(jnp.float32),
        "wv": (std_v * jax.random.normal(kv, (d_model, n_head * d_v))).astype(jnp.float32),
        "wfc": (std_fc * jax.random.normal(kfc, (n_head * d_model, d_model))).astype(jnp.float32),
        # mildly perturbed affine params so the LayerNorm affine path is exercised
        "g1": (1.0 + 0.1 * jax.random.normal(kg, (1, d_model))).astype(jnp.float32),
        "b1": (0.1 * jax.random.normal(kb, (1, d_model))).astype(jnp.float32),
        "g2": (1.0 - 0.1 * jax.random.normal(kg, (1, d_model))).astype(jnp.float32),
        "b2": (-0.1 * jax.random.normal(kb, (1, d_model))).astype(jnp.float32),
    }

    q = jax.random.normal(kxq, (B, L, d_model), jnp.float32)
    k = jax.random.normal(kxk, (B, L, d_model), jnp.float32)
    v = jax.random.normal(kxv, (B, L, d_model), jnp.float32)

    out = multi_head_attention(q, k, v, params, d_k=d_k)
    out = jax.block_until_ready(out)

    ref = jax.block_until_ready(reference(q, k, v, params, d_k=d_k))
    # Tolerance slightly looser than before to cover the approximate EUP
    # reciprocal used in the softmax denominator (pl.reciprocal(approx=True)).
    np.testing.assert_allclose(np.asarray(out), np.asarray(ref), rtol=2e-3, atol=2e-3)

    print("KERNEL_OK")
</pallas_src>

<mosaic_0001>
module attributes {stable_mosaic.version = 11 : i64} {
  func.func @mha_kernel(%arg0: i32, %arg1: memref<5x40xf32, #tpu.memory_space<vmem>>, %arg2: memref<40x5xf32, #tpu.memory_space<vmem>>, %arg3: memref<1x40x128xf32, #tpu.memory_space<vmem>>, %arg4: memref<1x40x128xf32, #tpu.memory_space<vmem>>, %arg5: memref<1x40x128xf32, #tpu.memory_space<vmem>>, %arg6: memref<128x128xf32, #tpu.memory_space<vmem>>, %arg7: memref<128x256xf32, #tpu.memory_space<vmem>>, %arg8: memref<128x128xf32, #tpu.memory_space<vmem>>, %arg9: memref<4x128xf32, #tpu.memory_space<vmem>>, %arg10: memref<1x40x128xf32, #tpu.memory_space<vmem>>) attributes {dimension_semantics = [#tpu.dimension_semantics<parallel>], iteration_bounds = array<i64: 2>, scalar_prefetch = 0 : i64, scratch_operands = 0 : i64, tpu.core_type = #tpu.core_type<tc>, window_params = [{pipeline_mode = #tpu.pipeline_mode<synchronous>, transform_indices = @transform_0, window_bounds = array<i64: 5, 40>}, {pipeline_mode = #tpu.pipeline_mode<synchronous>, transform_indices = @transform_1, window_bounds = array<i64: 40, 5>}, {transform_indices = @transform_2, window_bounds = array<i64: 1, 40, 128>}, {transform_indices = @transform_3, window_bounds = array<i64: 1, 40, 128>}, {transform_indices = @transform_4, window_bounds = array<i64: 1, 40, 128>}, {pipeline_mode = #tpu.pipeline_mode<synchronous>, transform_indices = @transform_5, window_bounds = array<i64: 128, 128>}, {pipeline_mode = #tpu.pipeline_mode<synchronous>, transform_indices = @transform_6, window_bounds = array<i64: 128, 256>}, {pipeline_mode = #tpu.pipeline_mode<synchronous>, transform_indices = @transform_7, window_bounds = array<i64: 128, 128>}, {pipeline_mode = #tpu.pipeline_mode<synchronous>, transform_indices = @transform_8, window_bounds = array<i64: 4, 128>}, {transform_indices = @transform_9, window_bounds = array<i64: 1, 40, 128>}]} {
    %c0 = arith.constant 0 : index
    %c0_0 = arith.constant 0 : index
    %c0_1 = arith.constant 0 : index
    %0 = vector.load %arg3[%c0, %c0_0, %c0_1] : memref<1x40x128xf32, #tpu.memory_space<vmem>>, vector<1x40x128xf32>
    %1 = vector.shape_cast %0 : vector<1x40x128xf32> to vector<40x128xf32>
    %c0_2 = arith.constant 0 : index
    %c0_3 = arith.constant 0 : index
    %c0_4 = arith.constant 0 : index
    %2 = vector.load %arg4[%c0_2, %c0_3, %c0_4] : memref<1x40x128xf32, #tpu.memory_space<vmem>>, vector<1x40x128xf32>
    %3 = vector.shape_cast %2 : vector<1x40x128xf32> to vector<40x128xf32>
    %c0_5 = arith.constant 0 : index
    %c0_6 = arith.constant 0 : index
    %c0_7 = arith.constant 0 : index
    %4 = vector.load %arg5[%c0_5, %c0_6, %c0_7] : memref<1x40x128xf32, #tpu.memory_space<vmem>>, vector<1x40x128xf32>
    %5 = vector.shape_cast %4 : vector<1x40x128xf32> to vector<40x128xf32>
    %6 = tpu.concatenate %3, %5 in 0 : vector<40x128xf32>, vector<40x128xf32> -> vector<80x128xf32>
    %c0_8 = arith.constant 0 : index
    %c0_9 = arith.constant 0 : index
    %7 = vector.load %arg7[%c0_8, %c0_9] : memref<128x256xf32, #tpu.memory_space<vmem>>, vector<128x256xf32>
    %cst = arith.constant dense<0.000000e+00> : vector<80x256xf32>
    %8 = tpu.matmul %6, %7, %cst {dimension_numbers = #tpu.dot_dimension_numbers<[1], [0], [0], [1], [0, 0, 1, 1], [], []>} : vector<80x128xf32>, vector<128x256xf32>, vector<80x256xf32> -> vector<80x256xf32>
    %9 = vector.extract_strided_slice %8 {offsets = [0, 0], sizes = [40, 128], strides = [1, 1]} : vector<80x256xf32> to vector<40x128xf32>
    %10 = vector.extract_strided_slice %8 {offsets = [40, 128], sizes = [40, 128], strides = [1, 1]} : vector<80x256xf32> to vector<40x128xf32>
    %c0_10 = arith.constant 0 : index
    %c0_11 = arith.constant 0 : index
    %11 = vector.load %arg1[%c0_10, %c0_11] : memref<5x40xf32, #tpu.memory_space<vmem>>, vector<5x40xf32>
    %cst_12 = arith.constant dense<0.000000e+00> : vector<5x128xf32>
    %12 = tpu.matmul %11, %1, %cst_12 {dimension_numbers = #tpu.dot_dimension_numbers<[1], [0], [0], [1], [0, 0, 1, 1], [], []>} : vector<5x40xf32>, vector<40x128xf32>, vector<5x128xf32> -> vector<5x128xf32>
    %c0_13 = arith.constant 0 : index
    %c0_14 = arith.constant 0 : index
    %13 = vector.load %arg6[%c0_13, %c0_14] : memref<128x128xf32, #tpu.memory_space<vmem>>, vector<128x128xf32>
    %cst_15 = arith.constant dense<0.000000e+00> : vector<5x128xf32>
    %14 = tpu.matmul %12, %13, %cst_15 {dimension_numbers = #tpu.dot_dimension_numbers<[1], [0], [0], [1], [0, 0, 1, 1], [], []>} : vector<5x128xf32>, vector<128x128xf32>, vector<5x128xf32> -> vector<5x128xf32>
    %cst_16 = arith.constant dense<0.000000e+00> : vector<5x40xf32>
    %15 = tpu.matmul %14, %9, %cst_16 {dimension_numbers = #tpu.dot_dimension_numbers<[1], [1], [0], [0], [0, 0, 1, 0], [], []>} : vector<5x128xf32>, vector<40x128xf32>, vector<5x40xf32> -> vector<5x40xf32>
    %cst_17 = arith.constant dense<0xFF800000> : vector<5xf32>
    %16 = vector.multi_reduction <maximumf>, %15, %cst_17 [1] : vector<5x40xf32> to vector<5xf32>
    %17 = vector.shape_cast %16 : vector<5xf32> to vector<5x1xf32>
    %18 = vector.broadcast %17 : vector<5x1xf32> to vector<5x40xf32>
    %19 = arith.subf %15, %18 : vector<5x40xf32>
    %20 = math.exp %19 : vector<5x40xf32>
    %cst_18 = arith.constant dense<0.000000e+00> : vector<5xf32>
    %21 = vector.multi_reduction <add>, %20, %cst_18 [1] : vector<5x40xf32> to vector<5xf32>
    %22 = vector.shape_cast %21 : vector<5xf32> to vector<5x1xf32>
    %23 = tpu.reciprocal %22 {approx = true} : vector<5x1xf32> -> vector<5x1xf32>
    %24 = vector.broadcast %23 : vector<5x1xf32> to vector<5x40xf32>
    %25 = arith.mulf %20, %24 : vector<5x40xf32>
    %cst_19 = arith.constant dense<0.000000e+00> : vector<5x128xf32>
    %26 = tpu.matmul %25, %10, %cst_19 {dimension_numbers = #tpu.dot_dimension_numbers<[1], [0], [0], [1], [0, 0, 1, 1], [], []>} : vector<5x40xf32>, vector<40x128xf32>, vector<5x128xf32> -> vector<5x128xf32>
    %c0_20 = arith.constant 0 : index
    %c0_21 = arith.constant 0 : index
    %27 = vector.load %arg2[%c0_20, %c0_21] : memref<40x5xf32, #tpu.memory_space<vmem>>, vector<40x5xf32>
    %cst_22 = arith.constant dense<0.000000e+00> : vector<40x128xf32>
    %28 = tpu.matmul %27, %26, %cst_22 {dimension_numbers = #tpu.dot_dimension_numbers<[1], [0], [0], [1], [0, 0, 1, 1], [], []>} : vector<40x5xf32>, vector<5x128xf32>, vector<40x128xf32> -> vector<40x128xf32>
    %c0_23 = arith.constant 0 : index
    %c0_24 = arith.constant 0 : index
    %29 = vector.load %arg9[%c0_23, %c0_24] : memref<4x128xf32, #tpu.memory_space<vmem>>, vector<4x128xf32>
    %30 = vector.extract_strided_slice %29 {offsets = [0, 0], sizes = [1, 128], strides = [1, 1]} : vector<4x128xf32> to vector<1x128xf32>
    %31 = vector.extract_strided_slice %29 {offsets = [1, 0], sizes = [1, 128], strides = [1, 1]} : vector<4x128xf32> to vector<1x128xf32>
    %32 = vector.extract_strided_slice %29 {offsets = [2, 0], sizes = [1, 128], strides = [1, 1]} : vector<4x128xf32> to vector<1x128xf32>
    %33 = vector.extract_strided_slice %29 {offsets = [3, 0], sizes = [1, 128], strides = [1, 1]} : vector<4x128xf32> to vector<1x128xf32>
    %34 = arith.addf %28, %9 : vector<40x128xf32>
    %cst_25 = arith.constant dense<0.000000e+00> : vector<40xf32>
    %35 = vector.multi_reduction <add>, %34, %cst_25 [1] : vector<40x128xf32> to vector<40xf32>
    %36 = vector.shape_cast %35 : vector<40xf32> to vector<40x1xf32>
    %cst_26 = arith.constant 1.280000e+02 : f32
    %37 = vector.broadcast %cst_26 : f32 to vector<40x1xf32>
    %38 = arith.divf %36, %37 : vector<40x1xf32>
    %39 = vector.broadcast %38 : vector<40x1xf32> to vector<40x128xf32>
    %40 = arith.subf %34, %39 : vector<40x128xf32>
    %41 = arith.mulf %40, %40 : vector<40x128xf32>
    %cst_27 = arith.constant dense<0.000000e+00> : vector<40xf32>
    %42 = vector.multi_reduction <add>, %41, %cst_27 [1] : vector<40x128xf32> to vector<40xf32>
    %43 = vector.shape_cast %42 : vector<40xf32> to vector<40x1xf32>
    %cst_28 = arith.constant 1.280000e+02 : f32
    %44 = vector.broadcast %cst_28 : f32 to vector<40x1xf32>
    %45 = arith.divf %43, %44 : vector<40x1xf32>
    %46 = vector.broadcast %38 : vector<40x1xf32> to vector<40x128xf32>
    %47 = arith.subf %34, %46 : vector<40x128xf32>
    %cst_29 = arith.constant 9.99999997E-7 : f32
    %48 = vector.broadcast %cst_29 : f32 to vector<40x1xf32>
    %49 = arith.addf %45, %48 : vector<40x1xf32>
    %50 = math.rsqrt %49 : vector<40x1xf32>
    %51 = vector.broadcast %50 : vector<40x1xf32> to vector<40x128xf32>
    %52 = arith.mulf %47, %51 : vector<40x128xf32>
    %53 = vector.broadcast %30 : vector<1x128xf32> to vector<40x128xf32>
    %54 = arith.mulf %52, %53 : vector<40x128xf32>
    %55 = vector.broadcast %31 : vector<1x128xf32> to vector<40x128xf32>
    %56 = arith.addf %54, %55 : vector<40x128xf32>
    %c0_30 = arith.constant 0 : index
    %c0_31 = arith.constant 0 : index
    %57 = vector.load %arg8[%c0_30, %c0_31] : memref<128x128xf32, #tpu.memory_space<vmem>>, vector<128x128xf32>
    %cst_32 = arith.constant dense<0.000000e+00> : vector<40x128xf32>
    %58 = tpu.matmul %56, %57, %cst_32 {dimension_numbers = #tpu.dot_dimension_numbers<[1], [0], [0], [1], [0, 0, 1, 1], [], []>} : vector<40x128xf32>, vector<128x128xf32>, vector<40x128xf32> -> vector<40x128xf32>
    %cst_33 = arith.constant 0.000000e+00 : f32
    %59 = vector.broadcast %cst_33 : f32 to vector<40x128xf32>
    %60 = arith.cmpf oge, %58, %59 : vector<40x128xf32>
    %cst_34 = arith.constant 1.000000e-01 : f32
    %61 = vector.broadcast %cst_34 : f32 to vector<40x128xf32>
    %62 = arith.mulf %61, %58 : vector<40x128xf32>
    %63 = arith.select %60, %58, %62 : vector<40x128xi1>, vector<40x128xf32>
    %64 = arith.addf %63, %56 : vector<40x128xf32>
    %cst_35 = arith.constant dense<0.000000e+00> : vector<40xf32>
    %65 = vector.multi_reduction <add>, %64, %cst_35 [1] : vector<40x128xf32> to vector<40xf32>
    %66 = vector.shape_cast %65 : vector<40xf32> to vector<40x1xf32>
    %cst_36 = arith.constant 1.280000e+02 : f32
    %67 = vector.broadcast %cst_36 : f32 to vector<40x1xf32>
    %68 = arith.divf %66, %67 : vector<40x1xf32>
    %69 = vector.broadcast %68 : vector<40x1xf32> to vector<40x128xf32>
    %70 = arith.subf %64, %69 : vector<40x128xf32>
    %71 = arith.mulf %70, %70 : vector<40x128xf32>
    %cst_37 = arith.constant dense<0.000000e+00> : vector<40xf32>
    %72 = vector.multi_reduction <add>, %71, %cst_37 [1] : vector<40x128xf32> to vector<40xf32>
    %73 = vector.shape_cast %72 : vector<40xf32> to vector<40x1xf32>
    %cst_38 = arith.constant 1.280000e+02 : f32
    %74 = vector.broadcast %cst_38 : f32 to vector<40x1xf32>
    %75 = arith.divf %73, %74 : vector<40x1xf32>
    %76 = vector.broadcast %68 : vector<40x1xf32> to vector<40x128xf32>
    %77 = arith.subf %64, %76 : vector<40x128xf32>
    %cst_39 = arith.constant 9.99999997E-7 : f32
    %78 = vector.broadcast %cst_39 : f32 to vector<40x1xf32>
    %79 = arith.addf %75, %78 : vector<40x1xf32>
    %80 = math.rsqrt %79 : vector<40x1xf32>
    %81 = vector.broadcast %80 : vector<40x1xf32> to vector<40x128xf32>
    %82 = arith.mulf %77, %81 : vector<40x128xf32>
    %83 = vector.broadcast %32 : vector<1x128xf32> to vector<40x128xf32>
    %84 = arith.mulf %82, %83 : vector<40x128xf32>
    %85 = vector.broadcast %33 : vector<1x128xf32> to vector<40x128xf32>
    %86 = arith.addf %84, %85 : vector<40x128xf32>
    %c0_40 = arith.constant 0 : index
    %c0_41 = arith.constant 0 : index
    %c0_42 = arith.constant 0 : index
    %87 = vector.load %arg10[%c0_40, %c0_41, %c0_42] : memref<1x40x128xf32, #tpu.memory_space<vmem>>, vector<1x40x128xf32>
    %88 = vector.shape_cast %87 : vector<1x40x128xf32> to vector<40x128xf32>
    %89 = vector.shape_cast %86 : vector<40x128xf32> to vector<1x40x128xf32>
    tpu.vector_store %arg10[%c0_40, %c0_41, %c0_42], %89 {strides = array<i32>} : memref<1x40x128xf32, #tpu.memory_space<vmem>>, vector<1x40x128xf32>,
    return
  }
  func.func @transform_0(%arg0: i32) -> (i32, i32) {
    %c0_i32 = arith.constant 0 : i32
    %c0_i32_0 = arith.constant 0 : i32
    %c0_i32_1 = arith.constant 0 : i32
    return %c0_i32, %c0_i32_0 : i32, i32
  }
  func.func @transform_1(%arg0: i32) -> (i32, i32) {
    %c0_i32 = arith.constant 0 : i32
    %c0_i32_0 = arith.constant 0 : i32
    %c0_i32_1 = arith.constant 0 : i32
    return %c0_i32, %c0_i32_0 : i32, i32
  }
  func.func @transform_2(%arg0: i32) -> (i32, i32, i32) {
    %c0_i32 = arith.constant 0 : i32
    %c0_i32_0 = arith.constant 0 : i32
    %c0_i32_1 = arith.constant 0 : i32
    return %arg0, %c0_i32, %c0_i32_0 : i32, i32, i32
  }
  func.func @transform_3(%arg0: i32) -> (i32, i32, i32) {
    %c0_i32 = arith.constant 0 : i32
    %c0_i32_0 = arith.constant 0 : i32
    %c0_i32_1 = arith.constant 0 : i32
    return %arg0, %c0_i32, %c0_i32_0 : i32, i32, i32
  }
  func.func @transform_4(%arg0: i32) -> (i32, i32, i32) {
    %c0_i32 = arith.constant 0 : i32
    %c0_i32_0 = arith.constant 0 : i32
    %c0_i32_1 = arith.constant 0 : i32
    return %arg0, %c0_i32, %c0_i32_0 : i32, i32, i32
  }
  func.func @transform_5(%arg0: i32) -> (i32, i32) {
    %c0_i32 = arith.constant 0 : i32
    %c0_i32_0 = arith.constant 0 : i32
    %c0_i32_1 = arith.constant 0 : i32
    return %c0_i32, %c0_i32_0 : i32, i32
  }
  func.func @transform_6(%arg0: i32) -> (i32, i32) {
    %c0_i32 = arith.constant 0 : i32
    %c0_i32_0 = arith.constant 0 : i32
    %c0_i32_1 = arith.constant 0 : i32
    return %c0_i32, %c0_i32_0 : i32, i32
  }
  func.func @transform_7(%arg0: i32) -> (i32, i32) {
    %c0_i32 = arith.constant 0 : i32
    %c0_i32_0 = arith.constant 0 : i32
    %c0_i32_1 = arith.constant 0 : i32
    return %c0_i32, %c0_i32_0 : i32, i32
  }
  func.func @transform_8(%arg0: i32) -> (i32, i32) {
    %c0_i32 = arith.constant 0 : i32
    %c0_i32_0 = arith.constant 0 : i32
    %c0_i32_1 = arith.constant 0 : i32
    return %c0_i32, %c0_i32_0 : i32, i32
  }
  func.func @transform_9(%arg0: i32) -> (i32, i32, i32) {
    %c0_i32 = arith.constant 0 : i32
    %c0_i32_0 = arith.constant 0 : i32
    %c0_i32_1 = arith.constant 0 : i32
    return %arg0, %c0_i32, %c0_i32_0 : i32, i32, i32
  }
}

</mosaic_0001>

<llo_original>
// kernel: tpu_custom_call.1
$region0: #{tpu_custom_call.1}
  #allocation0 [shape = 'u32[]', space=smem, size = 0x4, offset = 0x4, fixed_abs, tag = 'smem constant byte address 0x4 - core index']
  #allocation1 [shape = 'u32[144,128]{1,0:T(1,128)}', space=vmem, size = 0x12000, scoped, tag = 'internal scratch']
  %s0 = inlined_call_operand.vmem [shape: f32[5,40], index: 0, kind: input, shape index: {}]
  %s1 = inlined_call_operand.vmem [shape: f32[40,5], index: 1, kind: input, shape index: {}]
  %s2 = inlined_call_operand.hbm [shape: f32[2,40,128], index: 2, kind: input, shape index: {}]
  %s3 = inlined_call_operand.hbm [shape: f32[2,40,128], index: 3, kind: input, shape index: {}]
  %s4 = inlined_call_operand.hbm [shape: f32[2,40,128], index: 4, kind: input, shape index: {}]
  %s5 = inlined_call_operand.hbm [shape: f32[128,128], index: 5, kind: input, shape index: {}]
  %s6 = inlined_call_operand.hbm [shape: f32[128,256], index: 6, kind: input, shape index: {}]
  %s7 = inlined_call_operand.hbm [shape: f32[128,128], index: 7, kind: input, shape index: {}]
  %s8 = inlined_call_operand.vmem [shape: f32[4,128], index: 8, kind: input, shape index: {}]
  %s9 = inlined_call_operand.hbm [shape: f32[2,40,128], index: 9, kind: output, shape index: {}]
  %s10 = sld [smem:[#allocation0]]
  $region93: #{tpu_custom_call.1} parent=0
    _
  %s12 = ssub.s32 1, %s10
  %s13 = scalar_select 0, %s12, %s10
  $region1: #{tpu_custom_call.1} parent=0
    #allocation2 [shape = 'u8[40960]{0}', space=vmem, size = 0xa000, scoped, tag = 'input window, operand 2']
    #allocation3 [shape = 's32[2]{0}', space=sflag, size = 0x8, scoped, tag = 'scoped memory for tpu_custom_call.1']
    #allocation4 [shape = 's32[2]{0}', space=sflag, size = 0x8, scoped, tag = 'scoped memory for tpu_custom_call.1']
    #allocation5 [shape = 'u8[40960]{0}', space=vmem, size = 0xa000, scoped, tag = 'input window, operand 3']
    #allocation6 [shape = 's32[2]{0}', space=sflag, size = 0x8, scoped, tag = 'scoped memory for tpu_custom_call.1']
    #allocation7 [shape = 'u8[40960]{0}', space=vmem, size = 0xa000, scoped, tag = 'input window, operand 4']
    #allocation8 [shape = 'u8[65536]{0}', space=vmem, size = 0x10000, scoped, tag = 'input window, operand 5, single buffered']
    #allocation9 [shape = 's32[1]{0}', space=sflag, size = 0x4, scoped, tag = 'scoped memory for tpu_custom_call.1']
    #allocation10 [shape = 'u8[131072]{0}', space=vmem, size = 0x20000, scoped, tag = 'input window, operand 6, single buffered']
    #allocation11 [shape = 'u8[65536]{0}', space=vmem, size = 0x10000, scoped, tag = 'input window, operand 7, single buffered']
    #allocation12 [shape = 's32[1]{0}', space=sflag, size = 0x4, scoped, tag = 'scoped memory for tpu_custom_call.1']
    #allocation13 [shape = 'u8[40960]{0}', space=vmem, size = 0xa000, scoped, tag = 'output window, operand 0']
    %14 = vsyncpa [#allocation3], 0
    %s15 = scalar_lea.sflag [#allocation3], 1
    %16 = vsyncpa %s15, 0
    %17 = vsyncpa [#allocation6], 0
    %s18 = scalar_lea.sflag [#allocation6], 1
    %19 = vsyncpa %s18, 0
    %20 = vsyncpa [#allocation9], 0
    %21 = vsyncpa [#allocation12], 0
    %22 = vsyncpa [#allocation4], 0
    %s23 = scalar_lea.sflag [#allocation4], 1
    %24 = vsyncpa %s23, 0
    loop: start=0, step=1, limit=4
    $region2: #{tpu_custom_call.1} parent=1 // loop_pre_header
      _
    $region3: #{tpu_custom_call.1} parent=1 // loop_header
      %s26 = sphi 0, %s30
      %p27 = scmp.ge.s32.totalorder %s26, 4
      %s34 = sphi 0, %s34
      %s36 = sphi 0, %s34
      %s37 = sphi 0, %s36
      %s51 = sphi 0, %s37
      %s55 = sphi 0, %s55
      %s57 = sphi 0, %s55
      %s58 = sphi 0, %s57
      %s72 = sphi 0, %s58
      %s78 = sphi 0, %s80
      %s81 = sphi 0, %s78
      %s82 = sphi 0, %s81
      %s98 = sphi 0, %s82
      %s104 = sphi 0, %s106
      %s107 = sphi 0, %s104
      %s108 = sphi 0, %s107
      %s124 = sphi 0, %s108
      %s130 = sphi 0, %s132
      %s133 = sphi 0, %s130
      %s134 = sphi 0, %s133
      %s150 = sphi 0, %s134
      %s154 = sphi 0, %s154
      %s156 = sphi 0, %s154
      %s157 = sphi 0, %s156
      %s171 = sphi 0, %s157
      %s175 = sphi 0, %s175
      %s177 = sphi 0, %s175
      %s178 = sphi 0, %s177
      %s192 = sphi 0, %s178
      %s196 = sphi 0, %s196
      %s198 = sphi 0, %s196
      %s199 = sphi 0, %s198
      %s213 = sphi 0, %s199
      %s217 = sphi 0, %s217
      %s219 = sphi 0, %s217
      %s220 = sphi 0, %s219
      %s234 = sphi 0, %s220
      %s240 = sphi 0, %s242
      %s243 = sphi 0, %s240
      %s244 = sphi 0, %s243
      %s260 = sphi 0, %s244
    $region4: #{tpu_custom_call.1} parent=1 // loop_header_branch
      %29 = sbr.rel (%p27) target = $region8
    $region5: #{tpu_custom_call.1} parent=1 // loop_body
      %s31 = ssub.s32 %s26, 1
      %s32 = ssub.s32 %s26, 2
      %s33 = sadd.s32 %s26, 1
      %s35 = sadd.s32 %s34, 1
      %p38 = scmp.eq.s32.totalorder %s26, 1
      %p39 = scmp.ne.s32.totalorder %s34, %s36
      %p40 = scmp.eq.s32.totalorder %s26, 0
      %p41 = por %p39, %p40
      %p42 = scmp.ne.s32.totalorder %s34, %s36
      %p43 = scmp.eq.s32.totalorder %s31, 1
      %p44 = por %p42, %p43
      %p45 = scmp.ne.s32.totalorder %s36, %s37
      %p46 = scmp.eq.s32.totalorder %s31, 0
      %p47 = por %p45, %p46
      %p48 = scmp.ne.s32.totalorder %s36, %s37
      %p49 = scmp.eq.s32.totalorder %s32, 1
      %p50 = por %p48, %p49
      %p52 = scmp.ne.s32.totalorder %s37, %s51
      %p53 = scmp.eq.s32.totalorder %s32, 0
      %p54 = por %p52, %p53
      %s56 = sadd.s32 %s55, 1
      %p59 = scmp.eq.s32.totalorder %s26, 1
      %p60 = scmp.ne.s32.totalorder %s55, %s57
      %p61 = scmp.eq.s32.totalorder %s26, 0
      %p62 = por %p60, %p61
      %p63 = scmp.ne.s32.totalorder %s55, %s57
      %p64 = scmp.eq.s32.totalorder %s31, 1
      %p65 = por %p63, %p64
      %p66 = scmp.ne.s32.totalorder %s57, %s58
      %p67 = scmp.eq.s32.totalorder %s31, 0
      %p68 = por %p66, %p67
      %p69 = scmp.ne.s32.totalorder %s57, %s58
      %p70 = scmp.eq.s32.totalorder %s32, 1
      %p71 = por %p69, %p70
      %p73 = scmp.ne.s32.totalorder %s58, %s72
      %p74 = scmp.eq.s32.totalorder %s32, 0
      %p75 = por %p73, %p74
      %s76 = ssub.s32 %s26, %s33
      %p77 = scmp.eq.s32.totalorder %s76, 0
      %s79 = sadd.s32 %s78, 1
      %s80 = scalar_select %p77, %s78, %s79
      %p83 = pneg %p77
      %p84 = scmp.eq.s32.totalorder %s26, 1
      %p85 = por %p83, %p84
      %p86 = scmp.ne.s32.totalorder %s78, %s81
      %p87 = scmp.eq.s32.totalorder %s26, 0
      %p88 = por %p86, %p87
      %p89 = scmp.ne.s32.totalorder %s78, %s81
      %p90 = scmp.eq.s32.totalorder %s31, 1
      %p91 = por %p89, %p90
      %p92 = scmp.ne.s32.totalorder %s81, %s82
      %p93 = scmp.eq.s32.totalorder %s31, 0
      %p94 = por %p92, %p93
      %p95 = scmp.ne.s32.totalorder %s81, %s82
      %p96 = scmp.eq.s32.totalorder %s32, 1
      %p97 = por %p95, %p96
      %p99 = scmp.ne.s32.totalorder %s82, %s98
      %p100 = scmp.eq.s32.totalorder %s32, 0
      %p101 = por %p99, %p100
      %s102 = ssub.s32 %s26, %s33
      %p103 = scmp.eq.s32.totalorder %s102, 0
      %s105 = sadd.s32 %s104, 1
      %s106 = scalar_select %p103, %s104, %s105
      %p109 = pneg %p103
      %p110 = scmp.eq.s32.totalorder %s26, 1
      %p111 = por %p109, %p110
      %p112 = scmp.ne.s32.totalorder %s104, %s107
      %p113 = scmp.eq.s32.totalorder %s26, 0
      %p114 = por %p112, %p113
      %p115 = scmp.ne.s32.totalorder %s104, %s107
      %p116 = scmp.eq.s32.totalorder %s31, 1
      %p117 = por %p115, %p116
      %p118 = scmp.ne.s32.totalorder %s107, %s108
      %p119 = scmp.eq.s32.totalorder %s31, 0
      %p120 = por %p118, %p119
      %p121 = scmp.ne.s32.totalorder %s107, %s108
      %p122 = scmp.eq.s32.totalorder %s32, 1
      %p123 = por %p121, %p122
      %p125 = scmp.ne.s32.totalorder %s108, %s124
      %p126 = scmp.eq.s32.totalorder %s32, 0
      %p127 = por %p125, %p126
      %s128 = ssub.s32 %s26, %s33
      %p129 = scmp.eq.s32.totalorder %s128, 0
      %s131 = sadd.s32 %s130, 1
      %s132 = scalar_select %p129, %s130, %s131
      %p135 = pneg %p129
      %p136 = scmp.eq.s32.totalorder %s26, 1
      %p137 = por %p135, %p136
      %p138 = scmp.ne.s32.totalorder %s130, %s133
      %p139 = scmp.eq.s32.totalorder %s26, 0
      %p140 = por %p138, %p139
      %p141 = scmp.ne.s32.totalorder %s130, %s133
      %p142 = scmp.eq.s32.totalorder %s31, 1
      %p143 = por %p141, %p142
      %p144 = scmp.ne.s32.totalorder %s133, %s134
      %p145 = scmp.eq.s32.totalorder %s31, 0
      %p146 = por %p144, %p145
      %p147 = scmp.ne.s32.totalorder %s133, %s134
      %p148 = scmp.eq.s32.totalorder %s32, 1
      %p149 = por %p147, %p148
      %p151 = scmp.ne.s32.totalorder %s134, %s150
      %p152 = scmp.eq.s32.totalorder %s32, 0
      %p153 = por %p151, %p152
      %s155 = sadd.s32 %s154, 1
      %p158 = scmp.eq.s32.totalorder %s26, 1
      %p159 = scmp.ne.s32.totalorder %s154, %s156
      %p160 = scmp.eq.s32.totalorder %s26, 0
      %p161 = por %p159, %p160
      %p162 = scmp.ne.s32.totalorder %s154, %s156
      %p163 = scmp.eq.s32.totalorder %s31, 1
      %p164 = por %p162, %p163
      %p165 = scmp.ne.s32.totalorder %s156, %s157
      %p166 = scmp.eq.s32.totalorder %s31, 0
      %p167 = por %p165, %p166
      %p168 = scmp.ne.s32.totalorder %s156, %s157
      %p169 = scmp.eq.s32.totalorder %s32, 1
      %p170 = por %p168, %p169
      %p172 = scmp.ne.s32.totalorder %s157, %s171
      %p173 = scmp.eq.s32.totalorder %s32, 0
      %p174 = por %p172, %p173
      %s176 = sadd.s32 %s175, 1
      %p179 = scmp.eq.s32.totalorder %s26, 1
      %p180 = scmp.ne.s32.totalorder %s175, %s177
      %p181 = scmp.eq.s32.totalorder %s26, 0
      %p182 = por %p180, %p181
      %p183 = scmp.ne.s32.totalorder %s175, %s177
      %p184 = scmp.eq.s32.totalorder %s31, 1
      %p185 = por %p183, %p184
      %p186 = scmp.ne.s32.totalorder %s177, %s178
      %p187 = scmp.eq.s32.totalorder %s31, 0
      %p188 = por %p186, %p187
      %p189 = scmp.ne.s32.totalorder %s177, %s178
      %p190 = scmp.eq.s32.totalorder %s32, 1
      %p191 = por %p189, %p190
      %p193 = scmp.ne.s32.totalorder %s178, %s192
      %p194 = scmp.eq.s32.totalorder %s32, 0
      %p195 = por %p193, %p194
      %s197 = sadd.s32 %s196, 1
      %p200 = scmp.eq.s32.totalorder %s26, 1
      %p201 = scmp.ne.s32.totalorder %s196, %s198
      %p202 = scmp.eq.s32.totalorder %s26, 0
      %p203 = por %p201, %p202
      %p204 = scmp.ne.s32.totalorder %s196, %s198
      %p205 = scmp.eq.s32.totalorder %s31, 1
      %p206 = por %p204, %p205
      %p207 = scmp.ne.s32.totalorder %s198, %s199
      %p208 = scmp.eq.s32.totalorder %s31, 0
      %p209 = por %p207, %p208
      %p210 = scmp.ne.s32.totalorder %s198, %s199
      %p211 = scmp.eq.s32.totalorder %s32, 1
      %p212 = por %p210, %p211
      %p214 = scmp.ne.s32.totalorder %s199, %s213
      %p215 = scmp.eq.s32.totalorder %s32, 0
      %p216 = por %p214, %p215
      %s218 = sadd.s32 %s217, 1
      %p221 = scmp.eq.s32.totalorder %s26, 1
      %p222 = scmp.ne.s32.totalorder %s217, %s219
      %p223 = scmp.eq.s32.totalorder %s26, 0
      %p224 = por %p222, %p223
      %p225 = scmp.ne.s32.totalorder %s217, %s219
      %p226 = scmp.eq.s32.totalorder %s31, 1
      %p227 = por %p225, %p226
      %p228 = scmp.ne.s32.totalorder %s219, %s220
      %p229 = scmp.eq.s32.totalorder %s31, 0
      %p230 = por %p228, %p229
      %p231 = scmp.ne.s32.totalorder %s219, %s220
      %p232 = scmp.eq.s32.totalorder %s32, 1
      %p233 = por %p231, %p232
      %p235 = scmp.ne.s32.totalorder %s220, %s234
      %p236 = scmp.eq.s32.totalorder %s32, 0
      %p237 = por %p235, %p236
      %s238 = ssub.s32 %s26, %s33
      %p239 = scmp.eq.s32.totalorder %s238, 0
      %s241 = sadd.s32 %s240, 1
      %s242 = scalar_select %p239, %s240, %s241
      %p245 = pneg %p239
      %p246 = scmp.eq.s32.totalorder %s26, 1
      %p247 = por %p245, %p246
      %p248 = scmp.ne.s32.totalorder %s240, %s243
      %p249 = scmp.eq.s32.totalorder %s26, 0
      %p250 = por %p248, %p249
      %p251 = scmp.ne.s32.totalorder %s240, %s243
      %p252 = scmp.eq.s32.totalorder %s31, 1
      %p253 = por %p251, %p252
      %p254 = scmp.ne.s32.totalorder %s243, %s244
      %p255 = scmp.eq.s32.totalorder %s31, 0
      %p256 = por %p254, %p255
      %p257 = scmp.ne.s32.totalorder %s243, %s244
      %p258 = scmp.eq.s32.totalorder %s32, 1
      %p259 = por %p257, %p258
      %p261 = scmp.ne.s32.totalorder %s244, %s260
      %p262 = scmp.eq.s32.totalorder %s32, 0
      %p263 = por %p261, %p262
      %p264 = scmp.le.s32.totalorder 1, %s26
      %p265 = scmp.lt.s32.totalorder %s26, 3
      %p266 = pnand %p264, %p265
      %p267 = pneg %p266
      // Predicated region
      $region9: #{tpu_custom_call.1} parent=5 // pred_check
        _
      $region10: #{tpu_custom_call.1} parent=5 // pred_check_branch
        %269 = sbr.rel (%p266) target = $region12
      $region11: #{tpu_custom_call.1} parent=5 // pred_region
        %s270 = ssub.s32 %s26, 1
        // Predicated region
        $region13: #{tpu_custom_call.1} parent=11 // pred_check
          %p271 = pneg %p47
        $region14: #{tpu_custom_call.1} parent=11 // pred_check_branch
          %273 = sbr.rel (%p271) target = $region16
        $region15: #{tpu_custom_call.1} parent=11 // pred_region
          _
        $region16: #{tpu_custom_call.1} parent=11 // pred_fallthru
          _
        // Predicated region
        $region17: #{tpu_custom_call.1} parent=11 // pred_check
          %p274 = pneg %p68
        $region18: #{tpu_custom_call.1} parent=11 // pred_check_branch
          %276 = sbr.rel (%p274) target = $region20
        $region19: #{tpu_custom_call.1} parent=11 // pred_region
          _
        $region20: #{tpu_custom_call.1} parent=11 // pred_fallthru
          _
        // Predicated region
        $region21: #{tpu_custom_call.1} parent=11 // pred_check
          %p277 = pneg %p167
        $region22: #{tpu_custom_call.1} parent=11 // pred_check_branch
          %279 = sbr.rel (%p277) target = $region24
        $region23: #{tpu_custom_call.1} parent=11 // pred_region
          %s281 = ssub.s32 2048, 2048
          %282 = vsyncadd [#allocation9], %s281
          %s283 = sshll.u32 [#allocation8], 4
          %s284 = int_to_ptr.vmem [resolvable:$true] %s283
          %289 = dma.hbm_to_vmem [thread:$0]  %s5, 2048, %s284, [#allocation9], 128, 128, 8
        $region24: #{tpu_custom_call.1} parent=11 // pred_fallthru
          _
        // Predicated region
        $region25: #{tpu_custom_call.1} parent=11 // pred_check
          %p290 = pneg %p188
        $region26: #{tpu_custom_call.1} parent=11 // pred_check_branch
          %292 = sbr.rel (%p290) target = $region28
        $region27: #{tpu_custom_call.1} parent=11 // pred_region
          %s294 = ssub.s32 4096, 4096
          %295 = vsyncadd [#allocation9], %s294
          %s296 = sshll.u32 [#allocation10], 4
          %s297 = int_to_ptr.vmem [resolvable:$true] %s296
          %302 = dma.hbm_to_vmem [thread:$0]  %s6, 4096, %s297, [#allocation9], 256, 256, 16
        $region28: #{tpu_custom_call.1} parent=11 // pred_fallthru
          _
        // Predicated region
        $region29: #{tpu_custom_call.1} parent=11 // pred_check
          %p303 = pneg %p209
        $region30: #{tpu_custom_call.1} parent=11 // pred_check_branch
          %305 = sbr.rel (%p303) target = $region32
        $region31: #{tpu_custom_call.1} parent=11 // pred_region
          %s307 = ssub.s32 2048, 2048
          %308 = vsyncadd [#allocation12], %s307
          %s309 = sshll.u32 [#allocation11], 4
          %s310 = int_to_ptr.vmem [resolvable:$true] %s309
          %315 = dma.hbm_to_vmem [thread:$0]  %s7, 2048, %s310, [#allocation12], 128, 128, 8
        $region32: #{tpu_custom_call.1} parent=11 // pred_fallthru
          _
        // Predicated region
        $region33: #{tpu_custom_call.1} parent=11 // pred_check
          %p316 = pneg %p230
        $region34: #{tpu_custom_call.1} parent=11 // pred_check_branch
          %318 = sbr.rel (%p316) target = $region36
        $region35: #{tpu_custom_call.1} parent=11 // pred_region
          _
        $region36: #{tpu_custom_call.1} parent=11 // pred_fallthru
          _
      $region12: #{tpu_custom_call.1} parent=5 // pred_fallthru
        _
      %p319 = scmp.lt.s32.totalorder %s26, 2
      // Predicated region
      $region37: #{tpu_custom_call.1} parent=5 // pred_check
        %p320 = pneg %p319
      $region38: #{tpu_custom_call.1} parent=5 // pred_check_branch
        %322 = sbr.rel (%p320) target = $region40
      $region39: #{tpu_custom_call.1} parent=5 // pred_region
        // Predicated region
        $region41: #{tpu_custom_call.1} parent=39 // pred_check
          %p323 = pneg %p88
        $region42: #{tpu_custom_call.1} parent=39 // pred_check_branch
          %325 = sbr.rel (%p323) target = $region44
        $region43: #{tpu_custom_call.1} parent=39 // pred_region
          %s326 = sand.u32 %s78, 1
          %s327 = scalar_lea.sflag [#allocation3], %s326
          %s328 = sand.u32 %s78, 1
          %s329 = smul.addr %s328, 40
          %s330 = scalar_lea.vmem [#allocation2], %s329
          %s332 = ssub.s32 640, 640
          %333 = vsyncadd %s327, %s332
          %s334 = smul.addr %s26, 5
          %s335 = smul.addr %s334, 128
          %s336 = scalar_lea.hbm %s2, %s335
          %s337 = sshll.u32 %s330, 4
          %s338 = int_to_ptr.vmem [resolvable:$true] %s337
          %343 = dma.hbm_to_vmem [thread:$0]  %s336, 640, %s338, %s327, 128, 128, 8
        $region44: #{tpu_custom_call.1} parent=39 // pred_fallthru
          _
        // Predicated region
        $region45: #{tpu_custom_call.1} parent=39 // pred_check
          %p344 = pneg %p114
        $region46: #{tpu_custom_call.1} parent=39 // pred_check_branch
          %346 = sbr.rel (%p344) target = $region48
        $region47: #{tpu_custom_call.1} parent=39 // pred_region
          %s347 = sand.u32 %s26, 1
          %s348 = scalar_lea.sflag [#allocation6], %s347
          %s349 = sand.u32 %s104, 1
          %s350 = smul.addr %s349, 40
          %s351 = scalar_lea.vmem [#allocation5], %s350
          %s353 = ssub.s32 640, 640
          %354 = vsyncadd %s348, %s353
          %s355 = smul.addr %s26, 5
          %s356 = smul.addr %s355, 128
          %s357 = scalar_lea.hbm %s3, %s356
          %s358 = sshll.u32 %s351, 4
          %s359 = int_to_ptr.vmem [resolvable:$true] %s358
          %364 = dma.hbm_to_vmem [thread:$0]  %s357, 640, %s359, %s348, 128, 128, 8
        $region48: #{tpu_custom_call.1} parent=39 // pred_fallthru
          _
        // Predicated region
        $region49: #{tpu_custom_call.1} parent=39 // pred_check
          %p365 = pneg %p140
        $region50: #{tpu_custom_call.1} parent=39 // pred_check_branch
          %367 = sbr.rel (%p365) target = $region52
        $region51: #{tpu_custom_call.1} parent=39 // pred_region
          %s368 = sand.u32 %s26, 1
          %s369 = scalar_lea.sflag [#allocation6], %s368
          %s370 = sand.u32 %s130, 1
          %s371 = smul.addr %s370, 40
          %s372 = scalar_lea.vmem [#allocation7], %s371
          %s374 = ssub.s32 640, 640
          %375 = vsyncadd %s369, %s374
          %s376 = smul.addr %s26, 5
          %s377 = smul.addr %s376, 128
          %s378 = scalar_lea.hbm %s4, %s377
          %s379 = sshll.u32 %s372, 4
          %s380 = int_to_ptr.vmem [resolvable:$true] %s379
          %385 = dma.hbm_to_vmem [thread:$0]  %s378, 640, %s380, %s369, 128, 128, 8
        $region52: #{tpu_custom_call.1} parent=39 // pred_fallthru
          _
      $region40: #{tpu_custom_call.1} parent=5 // pred_fallthru
        _
      %p386 = scmp.le.s32.totalorder 1, %s26
      %p387 = scmp.lt.s32.totalorder %s26, 3
      %p388 = pnand %p386, %p387
      %p389 = pneg %p388
      // Predicated region
      $region53: #{tpu_custom_call.1} parent=5 // pred_check
        _
      $region54: #{tpu_custom_call.1} parent=5 // pred_check_branch
        %391 = sbr.rel (%p388) target = $region56
      $region55: #{tpu_custom_call.1} parent=5 // pred_region
        %s392 = ssub.s32 %s26, 1
        %s393 = sand.u32 %s81, 1
        %s394 = scalar_lea.sflag [#allocation3], %s393
        %s395 = sand.u32 %s81, 1
        %s396 = smul.addr %s395, 40
        %s397 = scalar_lea.vmem [#allocation2], %s396
        // Predicated region
        $region57: #{tpu_custom_call.1} parent=55 // pred_check
          %p398 = pneg %p94
        $region58: #{tpu_custom_call.1} parent=55 // pred_check_branch
          %400 = sbr.rel (%p398) target = $region60
        $region59: #{tpu_custom_call.1} parent=55 // pred_region
          %401 = dma.done %s394, 640
        $region60: #{tpu_custom_call.1} parent=55 // pred_fallthru
          _
        %s402 = sand.u32 %s31, 1
        %s403 = scalar_lea.sflag [#allocation6], %s402
        %s404 = sand.u32 %s107, 1
        %s405 = smul.addr %s404, 40
        %s406 = scalar_lea.vmem [#allocation5], %s405
        // Predicated region
        $region61: #{tpu_custom_call.1} parent=55 // pred_check
          %p407 = pneg %p120
        $region62: #{tpu_custom_call.1} parent=55 // pred_check_branch
          %409 = sbr.rel (%p407) target = $region64
        $region63: #{tpu_custom_call.1} parent=55 // pred_region
          %410 = dma.done %s403, 640
        $region64: #{tpu_custom_call.1} parent=55 // pred_fallthru
          _
        %s411 = sand.u32 %s31, 1
        %s412 = scalar_lea.sflag [#allocation6], %s411
        %s413 = sand.u32 %s133, 1
        %s414 = smul.addr %s413, 40
        %s415 = scalar_lea.vmem [#allocation7], %s414
        // Predicated region
        $region65: #{tpu_custom_call.1} parent=55 // pred_check
          %p416 = pneg %p146
        $region66: #{tpu_custom_call.1} parent=55 // pred_check_branch
          %418 = sbr.rel (%p416) target = $region68
        $region67: #{tpu_custom_call.1} parent=55 // pred_region
          %419 = dma.done %s412, 640
        $region68: #{tpu_custom_call.1} parent=55 // pred_fallthru
          _
        // Predicated region
        $region69: #{tpu_custom_call.1} parent=55 // pred_check
          %p420 = pneg %p167
        $region70: #{tpu_custom_call.1} parent=55 // pred_check_branch
          %422 = sbr.rel (%p420) target = $region72
        $region71: #{tpu_custom_call.1} parent=55 // pred_region
          %423 = dma.done [#allocation9], 2048
        $region72: #{tpu_custom_call.1} parent=55 // pred_fallthru
          _
        // Predicated region
        $region73: #{tpu_custom_call.1} parent=55 // pred_check
          %p424 = pneg %p188
        $region74: #{tpu_custom_call.1} parent=55 // pred_check_branch
          %426 = sbr.rel (%p424) target = $region76
        $region75: #{tpu_custom_call.1} parent=55 // pred_region
          %427 = dma.done [#allocation9], 4096
        $region76: #{tpu_custom_call.1} parent=55 // pred_fallthru
          _
        // Predicated region
        $region77: #{tpu_custom_call.1} parent=55 // pred_check
          %p428 = pneg %p209
        $region78: #{tpu_custom_call.1} parent=55 // pred_check_branch
          %430 = sbr.rel (%p428) target = $region80
        $region79: #{tpu_custom_call.1} parent=55 // pred_region
          %431 = dma.done [#allocation12], 2048
        $region80: #{tpu_custom_call.1} parent=55 // pred_fallthru
          _
        %p432 = pneg %p47
        %p433 = pneg %p44
        %p434 = pneg %p68
        %p435 = pneg %p65
        %s436 = sand.u32 %s81, 1
        %s437 = scalar_lea.sflag [#allocation3], %s436
        %s438 = sand.u32 %s81, 1
        %s439 = smul.addr %s438, 40
        %s440 = scalar_lea.vmem [#allocation2], %s439
        %p441 = pneg %p94
        %p442 = pneg %p91
        %s443 = sand.u32 %s31, 1
        %s444 = scalar_lea.sflag [#allocation6], %s443
        %s445 = sand.u32 %s107, 1
        %s446 = smul.addr %s445, 40
        %s447 = scalar_lea.vmem [#allocation5], %s446
        %p448 = pneg %p120
        %p449 = pneg %p117
        %s450 = sand.u32 %s31, 1
        %s451 = scalar_lea.sflag [#allocation6], %s450
        %s452 = sand.u32 %s133, 1
        %s453 = smul.addr %s452, 40
        %s454 = scalar_lea.vmem [#allocation7], %s453
        %p455 = pneg %p146
        %p456 = pneg %p143
        %p457 = pneg %p167
        %p458 = pneg %p164
        %p459 = pneg %p188
        %p460 = pneg %p185
        %p461 = pneg %p209
        %p462 = pneg %p206
        %p463 = pneg %p230
        %p464 = pneg %p227
        %p465 = pneg %p256
        %p466 = pneg %p253
        %s467 = sand.u32 %s243, 1
        %s468 = scalar_lea.sflag [#allocation4], %s467
        %s469 = sand.u32 %s243, 1
        %s470 = smul.addr %s469, 40
        %s471 = scalar_lea.vmem [#allocation13], %s470
        %v472 = vld [vmem:[%s397] sm:$0xff]
        %v473 = vld [vmem:[%s397 + $0x8] sm:$0xff]
        %v474 = vld [vmem:[%s397 + $0x10] sm:$0xff]
        %v475 = vld [vmem:[%s397 + $0x18] sm:$0xff]
        %v476 = vld [vmem:[%s397 + $0x20] sm:$0xff]
        %v477 = vld [vmem:[%s406] sm:$0xff]
        %v478 = vld [vmem:[%s406 + $0x8] sm:$0xff]
        %v479 = vld [vmem:[%s406 + $0x10] sm:$0xff]
        %v480 = vld [vmem:[%s406 + $0x18] sm:$0xff]
        %v481 = vld [vmem:[%s406 + $0x20] sm:$0xff]
        %v482 = vld [vmem:[%s415] sm:$0xff]
        %v483 = vld [vmem:[%s415 + $0x8] sm:$0xff]
        %v484 = vld [vmem:[%s415 + $0x10] sm:$0xff]
        %v485 = vld [vmem:[%s415 + $0x18] sm:$0xff]
        %v486 = vld [vmem:[%s415 + $0x20] sm:$0xff]
        %v487 = vld [vmem:[#allocation10] sm:$0xff]
        %v488 = vld [vmem:[#allocation10 + $0x8] sm:$0xff]
        %v489 = vld [vmem:[#allocation10 + $0x10] sm:$0xff]
        %v490 = vld [vmem:[#allocation10 + $0x18] sm:$0xff]
        %v491 = vld [vmem:[#allocation10 + $0x20] sm:$0xff]
        %v492 = vld [vmem:[#allocation10 + $0x28] sm:$0xff]
        %v493 = vld [vmem:[#allocation10 + $0x30] sm:$0xff]
        %v494 = vld [vmem:[#allocation10 + $0x38] sm:$0xff]
        %v495 = vld [vmem:[#allocation10 + $0x40] sm:$0xff]
        %v496 = vld [vmem:[#allocation10 + $0x48] sm:$0xff]
        %v497 = vld [vmem:[#allocation10 + $0x50] sm:$0xff]
        %v498 = vld [vmem:[#allocation10 + $0x58] sm:$0xff]
        %v499 = vld [vmem:[#allocation10 + $0x60] sm:$0xff]
        %v500 = vld [vmem:[#allocation10 + $0x68] sm:$0xff]
        %v501 = vld [vmem:[#allocation10 + $0x70] sm:$0xff]
        %v502 = vld [vmem:[#allocation10 + $0x78] sm:$0xff]
        %v503 = vld [vmem:[#allocation10 + $0x80] sm:$0xff]
        %v504 = vld [vmem:[#allocation10 + $0x88] sm:$0xff]
        %v505 = vld [vmem:[#allocation10 + $0x90] sm:$0xff]
        %v506 = vld [vmem:[#allocation10 + $0x98] sm:$0xff]
        %v507 = vld [vmem:[#allocation10 + $0xa0] sm:$0xff]
        %v508 = vld [vmem:[#allocation10 + $0xa8] sm:$0xff]
        %v509 = vld [vmem:[#allocation10 + $0xb0] sm:$0xff]
        %v510 = vld [vmem:[#allocation10 + $0xb8] sm:$0xff]
        %v511 = vld [vmem:[#allocation10 + $0xc0] sm:$0xff]
        %v512 = vld [vmem:[#allocation10 + $0xc8] sm:$0xff]
        %v513 = vld [vmem:[#allocation10 + $0xd0] sm:$0xff]
        %v514 = vld [vmem:[#allocation10 + $0xd8] sm:$0xff]
        %v515 = vld [vmem:[#allocation10 + $0xe0] sm:$0xff]
        %v516 = vld [vmem:[#allocation10 + $0xe8] sm:$0xff]
        %v517 = vld [vmem:[#allocation10 + $0xf0] sm:$0xff]
        %v518 = vld [vmem:[#allocation10 + $0xf8] sm:$0xff]
        %519 = vmatprep.subr.mxu0 %v488
        %520 = vmatpush1.msra.mxu0 %v487
        %521 = vmatprep.subr.mxu0 %v490
        %522 = vmatpush1.msra.mxu0 %v489
        %523 = vmatprep.subr.mxu0 %v492
        %524 = vmatpush1.msra.mxu0 %v491
        %525 = vmatprep.subr.mxu0 %v494
        %526 = vmatpush1.msra.mxu0 %v493
        %527 = vmatprep.subr.mxu0 %v496
        %528 = vmatpush1.msra.mxu0 %v495
        %529 = vmatprep.subr.mxu0 %v498
        %530 = vmatpush1.msra.mxu0 %v497
        %531 = vmatprep.subr.mxu0 %v500
        %532 = vmatpush1.msra.mxu0 %v499
        %533 = vmatprep.subr.mxu0 %v502
        %534 = vmatpush1.msra.mxu0 %v501
        %535 = vmatprep.subr.mxu0 %v504
        %536 = vmatpush1.msra.mxu0 %v503
        %537 = vmatprep.subr.mxu0 %v506
        %538 = vmatpush1.msra.mxu0 %v505
        %539 = vmatprep.subr.mxu0 %v508
        %540 = vmatpush1.msra.mxu0 %v507
        %541 = vmatprep.subr.mxu0 %v510
        %542 = vmatpush1.msra.mxu0 %v509
        %543 = vmatprep.subr.mxu0 %v512
        %544 = vmatpush1.msra.mxu0 %v511
        %545 = vmatprep.subr.mxu0 %v514
        %546 = vmatpush1.msra.mxu0 %v513
        %547 = vmatprep.subr.mxu0 %v516
        %548 = vmatpush1.msra.mxu0 %v515
        %549 = vmatprep.subr.mxu0 %v518
        %550 = vmatpush1.msra.mxu0 %v517
        %551 = vmatprep.subr.mxu0 0.0
        %552 = vmatpush1.msra.mxu0 0.0
        %553 = vmatprep.subr.mxu0 0.0
        %554 = vmatpush1.msra.mxu0 0.0
        %555 = vmatprep.subr.mxu0 0.0
        %556 = vmatpush1.msra.mxu0 0.0
        %557 = vmatprep.subr.mxu0 0.0
        %558 = vmatpush1.msra.mxu0 0.0
        %559 = vmatprep.subr.mxu0 0.0
        %560 = vmatpush1.msra.mxu0 0.0
        %561 = vmatprep.subr.mxu0 0.0
        %562 = vmatpush1.msra.mxu0 0.0
        %563 = vmatprep.subr.mxu0 0.0
        %564 = vmatpush1.msra.mxu0 0.0
        %565 = vmatprep.subr.mxu0 0.0
        %566 = vmatpush1.msra.mxu0 0.0
        %567 = vmatprep.subr.mxu0 0.0
        %568 = vmatpush1.msra.mxu0 0.0
        %569 = vmatprep.subr.mxu0 0.0
        %570 = vmatpush1.msra.mxu0 0.0
        %571 = vmatprep.subr.mxu0 0.0
        %572 = vmatpush1.msra.mxu0 0.0
        %573 = vmatprep.subr.mxu0 0.0
        %574 = vmatpush1.msra.mxu0 0.0
        %575 = vmatprep.subr.mxu0 0.0
        %576 = vmatpush1.msra.mxu0 0.0
        %577 = vmatprep.subr.mxu0 0.0
        %578 = vmatpush1.msra.mxu0 0.0
        %579 = vmatprep.subr.mxu0 0.0
        %580 = vmatpush1.msra.mxu0 0.0
        %581 = vmatprep.subr.mxu0 0.0
        %582 = vmatpush1.msra.mxu0 0.0
        %583 = vmatprep.mubr.f32.mxu0 0.0
        %584 = vmatmul.mubr.f32.gmra.mrb[0].mxu0 %v477
        %v585 = vpop.f32.mrb[0].mxu0
        %v586 = vadd.f32 0.0, %v585
        %v587 = vpop.f32.mrb[0].mxu0
        %588 = vmatprep.mubr.f32.mxu0 0.0
        %589 = vmatmul.mubr.f32.gmra.mrb[0].mxu0 %v478
        %v590 = vpop.f32.mrb[0].mxu0
        %v591 = vadd.f32 0.0, %v590
        %v592 = vpop.f32.mrb[0].mxu0
        %593 = vmatprep.mubr.f32.mxu0 0.0
        %594 = vmatmul.mubr.f32.gmra.mrb[0].mxu0 %v479
        %v595 = vpop.f32.mrb[0].mxu0
        %v596 = vadd.f32 0.0, %v595
        %v597 = vpop.f32.mrb[0].mxu0
        %598 = vmatprep.mubr.f32.mxu0 0.0
        %599 = vmatmul.mubr.f32.gmra.mrb[0].mxu0 %v480
        %v600 = vpop.f32.mrb[0].mxu0
        %v601 = vadd.f32 0.0, %v600
        %v602 = vpop.f32.mrb[0].mxu0
        %603 = vmatprep.mubr.f32.mxu0 0.0
        %604 = vmatmul.mubr.f32.gmra.mrb[0].mxu0 %v481
        %v605 = vpop.f32.mrb[0].mxu0
        %v606 = vadd.f32 0.0, %v605
        %v607 = vpop.f32.mrb[0].mxu0
        %608 = vmatprep.mubr.f32.mxu0 0.0
        %609 = vmatmul.mubr.f32.gmra.mrb[0].mxu0 %v482
        %v610 = vpop.f32.mrb[0].mxu0
        %v611 = vpop.f32.mrb[0].mxu0
        %v612 = vadd.f32 0.0, %v611
        %613 = vmatprep.mubr.f32.mxu0 0.0
        %614 = vmatmul.mubr.f32.gmra.mrb[0].mxu0 %v483
        %v615 = vpop.f32.mrb[0].mxu0
        %v616 = vpop.f32.mrb[0].mxu0
        %v617 = vadd.f32 0.0, %v616
        %618 = vmatprep.mubr.f32.mxu0 0.0
        %619 = vmatmul.mubr.f32.gmra.mrb[0].mxu0 %v484
        %v620 = vpop.f32.mrb[0].mxu0
        %v621 = vpop.f32.mrb[0].mxu0
        %v622 = vadd.f32 0.0, %v621
        %623 = vmatprep.mubr.f32.mxu0 0.0
        %624 = vmatmul.mubr.f32.gmra.mrb[0].mxu0 %v485
        %v625 = vpop.f32.mrb[0].mxu0
        %v626 = vpop.f32.mrb[0].mxu0
        %v627 = vadd.f32 0.0, %v626
        %628 = vmatprep.mubr.f32.mxu0 0.0
        %629 = vmatmul.mubr.f32.gmra.mrb[0].mxu0 %v486
        %v630 = vpop.f32.mrb[0].mxu0
        %v631 = vpop.f32.mrb[0].mxu0
        %v632 = vadd.f32 0.0, %v631
        %633 = vdwg.mxu0
        %v634 = vld [vmem:[%s0] sm:$0x1f]
        %vm635 = vcmask 326656
        %v637 = vsel %vm635, %v634, 0
        %639 = vmatprep.subr.mxu0 0.0
        %640 = vmatpush1.msra.mxu0 %v472
        %641 = vmatprep.subr.mxu0 0.0
        %642 = vmatpush1.msra.mxu0 %v473
        %643 = vmatprep.subr.mxu0 0.0
        %644 = vmatpush1.msra.mxu0 %v474
        %645 = vmatprep.subr.mxu0 0.0
        %646 = vmatpush1.msra.mxu0 %v475
        %647 = vmatprep.subr.mxu0 0.0
        %648 = vmatpush1.msra.mxu0 %v476
        %649 = vmatprep.subr.mxu0 0.0
        %650 = vmatpush1.msra.mxu0 0.0
        %651 = vmatprep.subr.mxu0 0.0
        %652 = vmatpush1.msra.mxu0 0.0
        %653 = vmatprep.subr.mxu0 0.0
        %654 = vmatpush1.msra.mxu0 0.0
        %655 = vmatprep.subr.mxu0 0.0
        %656 = vmatpush1.msra.mxu0 0.0
        %657 = vmatprep.subr.mxu0 0.0
        %658 = vmatpush1.msra.mxu0 0.0
        %659 = vmatprep.subr.mxu0 0.0
        %660 = vmatpush1.msra.mxu0 0.0
        %661 = vmatprep.subr.mxu0 0.0
        %662 = vmatpush1.msra.mxu0 0.0
        %663 = vmatprep.subr.mxu0 0.0
        %664 = vmatpush1.msra.mxu0 0.0
        %665 = vmatprep.subr.mxu0 0.0
        %666 = vmatpush1.msra.mxu0 0.0
        %667 = vmatprep.subr.mxu0 0.0
        %668 = vmatpush1.msra.mxu0 0.0
        %669 = vmatprep.subr.mxu0 0.0
        %670 = vmatpush1.msra.mxu0 0.0
        %671 = vmatprep.subr.mxu0 0.0
        %672 = vmatpush1.msra.mxu0 0.0
        %673 = vmatprep.subr.mxu0 0.0
        %674 = vmatpush1.msra.mxu0 0.0
        %675 = vmatprep.subr.mxu0 0.0
        %676 = vmatpush1.msra.mxu0 0.0
        %677 = vmatprep.subr.mxu0 0.0
        %678 = vmatpush1.msra.mxu0 0.0
        %679 = vmatprep.subr.mxu0 0.0
        %680 = vmatpush1.msra.mxu0 0.0
        %681 = vmatprep.subr.mxu0 0.0
        %682 = vmatpush1.msra.mxu0 0.0
        %683 = vmatprep.subr.mxu0 0.0
        %684 = vmatpush1.msra.mxu0 0.0
        %685 = vmatprep.subr.mxu0 0.0
        %686 = vmatpush1.msra.mxu0 0.0
        %687 = vmatprep.subr.mxu0 0.0
        %688 = vmatpush1.msra.mxu0 0.0
        %689 = vmatprep.subr.mxu0 0.0
        %690 = vmatpush1.msra.mxu0 0.0
        %691 = vmatprep.subr.mxu0 0.0
        %692 = vmatpush1.msra.mxu0 0.0
        %693 = vmatprep.subr.mxu0 0.0
        %694 = vmatpush1.msra.mxu0 0.0
        %695 = vmatprep.subr.mxu0 0.0
        %696 = vmatpush1.msra.mxu0 0.0
        %697 = vmatprep.subr.mxu0 0.0
        %698 = vmatpush1.msra.mxu0 0.0
        %699 = vmatprep.subr.mxu0 0.0
        %700 = vmatpush1.msra.mxu0 0.0
        %701 = vmatprep.subr.mxu0 0.0
        %702 = vmatpush1.msra.mxu0 0.0
        %703 = vmatprep.mubr.f32.mxu0 0.0
        %704 = vmatmul.mubr.f32.gmra.mrb[0].mxu0 %v637
        %v705 = vpop.f32.mrb[0].mxu0
        %v706 = vadd.f32 0.0, %v705
        %v707 = vpop.f32.mrb[0].mxu0
        %708 = vdwg.mxu0
        %v709 = vld [vmem:[#allocation8] sm:$0xff]
        %v710 = vld [vmem:[#allocation8 + $0x8] sm:$0xff]
        %v711 = vld [vmem:[#allocation8 + $0x10] sm:$0xff]
        %v712 = vld [vmem:[#allocation8 + $0x18] sm:$0xff]
        %v713 = vld [vmem:[#allocation8 + $0x20] sm:$0xff]
        %v714 = vld [vmem:[#allocation8 + $0x28] sm:$0xff]
        %v715 = vld [vmem:[#allocation8 + $0x30] sm:$0xff]
        %v716 = vld [vmem:[#allocation8 + $0x38] sm:$0xff]
        %v717 = vld [vmem:[#allocation8 + $0x40] sm:$0xff]
        %v718 = vld [vmem:[#allocation8 + $0x48] sm:$0xff]
        %v719 = vld [vmem:[#allocation8 + $0x50] sm:$0xff]
        %v720 = vld [vmem:[#allocation8 + $0x58] sm:$0xff]
        %v721 = vld [vmem:[#allocation8 + $0x60] sm:$0xff]
        %v722 = vld [vmem:[#allocation8 + $0x68] sm:$0xff]
        %v723 = vld [vmem:[#allocation8 + $0x70] sm:$0xff]
        %v724 = vld [vmem:[#allocation8 + $0x78] sm:$0xff]
        %725 = vmatprep.subr.mxu0 0.0
        %726 = vmatpush1.msra.mxu0 %v709
        %727 = vmatprep.subr.mxu0 0.0
        %728 = vmatpush1.msra.mxu0 %v710
        %729 = vmatprep.subr.mxu0 0.0
        %730 = vmatpush1.msra.mxu0 %v711
        %731 = vmatprep.subr.mxu0 0.0
        %732 = vmatpush1.msra.mxu0 %v712
        %733 = vmatprep.subr.mxu0 0.0
        %734 = vmatpush1.msra.mxu0 %v713
        %735 = vmatprep.subr.mxu0 0.0
        %736 = vmatpush1.msra.mxu0 %v714
        %737 = vmatprep.subr.mxu0 0.0
        %738 = vmatpush1.msra.mxu0 %v715
        %739 = vmatprep.subr.mxu0 0.0
        %740 = vmatpush1.msra.mxu0 %v716
        %741 = vmatprep.subr.mxu0 0.0
        %742 = vmatpush1.msra.mxu0 %v717
        %743 = vmatprep.subr.mxu0 0.0
        %744 = vmatpush1.msra.mxu0 %v718
        %745 = vmatprep.subr.mxu0 0.0
        %746 = vmatpush1.msra.mxu0 %v719
        %747 = vmatprep.subr.mxu0 0.0
        %748 = vmatpush1.msra.mxu0 %v720
        %749 = vmatprep.subr.mxu0 0.0
        %750 = vmatpush1.msra.mxu0 %v721
        %751 = vmatprep.subr.mxu0 0.0
        %752 = vmatpush1.msra.mxu0 %v722
        %753 = vmatprep.subr.mxu0 0.0
        %754 = vmatpush1.msra.mxu0 %v723
        %755 = vmatprep.subr.mxu0 0.0
        %756 = vmatpush1.msra.mxu0 %v724
        %757 = vmatprep.subr.mxu0 0.0
        %758 = vmatpush1.msra.mxu0 0.0
        %759 = vmatprep.subr.mxu0 0.0
        %760 = vmatpush1.msra.mxu0 0.0
        %761 = vmatprep.subr.mxu0 0.0
        %762 = vmatpush1.msra.mxu0 0.0
        %763 = vmatprep.subr.mxu0 0.0
        %764 = vmatpush1.msra.mxu0 0.0
        %765 = vmatprep.subr.mxu0 0.0
        %766 = vmatpush1.msra.mxu0 0.0
        %767 = vmatprep.subr.mxu0 0.0
        %768 = vmatpush1.msra.mxu0 0.0
        %769 = vmatprep.subr.mxu0 0.0
        %770 = vmatpush1.msra.mxu0 0.0
        %771 = vmatprep.subr.mxu0 0.0
        %772 = vmatpush1.msra.mxu0 0.0
        %773 = vmatprep.subr.mxu0 0.0
        %774 = vmatpush1.msra.mxu0 0.0
        %775 = vmatprep.subr.mxu0 0.0
        %776 = vmatpush1.msra.mxu0 0.0
        %777 = vmatprep.subr.mxu0 0.0
        %778 = vmatpush1.msra.mxu0 0.0
        %779 = vmatprep.subr.mxu0 0.0
        %780 = vmatpush1.msra.mxu0 0.0
        %781 = vmatprep.subr.mxu0 0.0
        %782 = vmatpush1.msra.mxu0 0.0
        %783 = vmatprep.subr.mxu0 0.0
        %784 = vmatpush1.msra.mxu0 0.0
        %785 = vmatprep.subr.mxu0 0.0
        %786 = vmatpush1.msra.mxu0 0.0
        %787 = vmatprep.subr.mxu0 0.0
        %788 = vmatpush1.msra.mxu0 0.0
        %789 = vmatprep.mubr.f32.mxu0 0.0
        %790 = vmatmul.mubr.f32.gmra.mrb[0].mxu0 %v706
        %v791 = vpop.f32.mrb[0].mxu0
        %v792 = vadd.f32 0.0, %v791
        %v793 = vpop.f32.mrb[0].mxu0
        %794 = vdwg.mxu0
        %795 = vmatprep.subr.mxu0 0.0
        %796 = vmatpush1.xpose.msra.mxu0 %v586
        %797 = vmatprep.subr.mxu0 0.0
        %798 = vmatpush1.xpose.msra.mxu0 %v591
        %799 = vmatprep.subr.mxu0 0.0
        %800 = vmatpush1.xpose.msra.mxu0 %v596
        %801 = vmatprep.subr.mxu0 0.0
        %802 = vmatpush1.xpose.msra.mxu0 %v601
        %803 = vmatprep.subr.mxu0 0.0
        %804 = vmatpush1.xpose.msra.mxu0 %v606
        %805 = vmatprep.subr.mxu0 0.0
        %806 = vmatpush1.xpose.msra.mxu0 0.0
        %807 = vmatprep.subr.mxu0 0.0
        %808 = vmatpush1.xpose.msra.mxu0 0.0
        %809 = vmatprep.subr.mxu0 0.0
        %810 = vmatpush1.xpose.msra.mxu0 0.0
        %811 = vmatprep.subr.mxu0 0.0
        %812 = vmatpush1.xpose.msra.mxu0 0.0
        %813 = vmatprep.subr.mxu0 0.0
        %814 = vmatpush1.xpose.msra.mxu0 0.0
        %815 = vmatprep.subr.mxu0 0.0
        %816 = vmatpush1.xpose.msra.mxu0 0.0
        %817 = vmatprep.subr.mxu0 0.0
        %818 = vmatpush1.xpose.msra.mxu0 0.0
        %819 = vmatprep.subr.mxu0 0.0
        %820 = vmatpush1.xpose.msra.mxu0 0.0
        %821 = vmatprep.subr.mxu0 0.0
        %822 = vmatpush1.xpose.msra.mxu0 0.0
        %823 = vmatprep.subr.mxu0 0.0
        %824 = vmatpush1.xpose.msra.mxu0 0.0
        %825 = vmatprep.subr.mxu0 0.0
        %826 = vmatpush1.xpose.msra.mxu0 0.0
        %827 = vmatprep.subr.mxu0 0.0
        %828 = vmatpush1.xpose.msra.mxu0 0.0
        %829 = vmatprep.subr.mxu0 0.0
        %830 = vmatpush1.xpose.msra.mxu0 0.0
        %831 = vmatprep.subr.mxu0 0.0
        %832 = vmatpush1.xpose.msra.mxu0 0.0
        %833 = vmatprep.subr.mxu0 0.0
        %834 = vmatpush1.xpose.msra.mxu0 0.0
        %835 = vmatprep.subr.mxu0 0.0
        %836 = vmatpush1.xpose.msra.mxu0 0.0
        %837 = vmatprep.subr.mxu0 0.0
        %838 = vmatpush1.xpose.msra.mxu0 0.0
        %839 = vmatprep.subr.mxu0 0.0
        %840 = vmatpush1.xpose.msra.mxu0 0.0
        %841 = vmatprep.subr.mxu0 0.0
        %842 = vmatpush1.xpose.msra.mxu0 0.0
        %843 = vmatprep.subr.mxu0 0.0
        %844 = vmatpush1.xpose.msra.mxu0 0.0
        %845 = vmatprep.subr.mxu0 0.0
        %846 = vmatpush1.xpose.msra.mxu0 0.0
        %847 = vmatprep.subr.mxu0 0.0
        %848 = vmatpush1.xpose.msra.mxu0 0.0
        %849 = vmatprep.subr.mxu0 0.0
        %850 = vmatpush1.xpose.msra.mxu0 0.0
        %851 = vmatprep.subr.mxu0 0.0
        %852 = vmatpush1.xpose.msra.mxu0 0.0
        %853 = vmatprep.subr.mxu0 0.0
        %854 = vmatpush1.xpose.msra.mxu0 0.0
        %855 = vmatprep.subr.mxu0 0.0
        %856 = vmatpush1.xpose.msra.mxu0 0.0
        %857 = vmatprep.subr.mxu0 0.0
        %858 = vmatpush1.xpose.msra.mxu0 0.0
        %859 = vmatprep.mubr.f32.mxu0 0.0
        %860 = vmatmul.mubr.f32.gmra.mrb[0].mxu0 %v792
        %v861 = vpop.f32.mrb[0].mxu0
        %v862 = vadd.f32 0.0, %v861
        %v863 = vpop.f32.mrb[0].mxu0
        %864 = vdwg.mxu0
        %vm865 = vcmask 323584
        %v866 = vsel %vm865, %v862, -inf
        %867 = vmax.xlane.f32.xlu0 %v866
        %v868 = vpop.xlane.xlu0 %867
        %v869 = vsub.f32 %v862, %v868
        %v870 = vmul.f32 %v869, 1.442695
        %v871 = vpow.pop %v870
        %v872 = vsel %vm865, %v871, 0.0
        %873 = vadd.xlane.f32.xlu0 %v872
        %v874 = vpop.xlane.xlu0 %873
        %v875 = vrcp.pop %v874
        %v876 = vmul.f32 %v871, %v875
        %v878 = vsel %vm635, %v876, 0
        %880 = vmatprep.subr.mxu0 0.0
        %881 = vmatpush1.msra.mxu0 %v612
        %882 = vmatprep.subr.mxu0 0.0
        %883 = vmatpush1.msra.mxu0 %v617
        %884 = vmatprep.subr.mxu0 0.0
        %885 = vmatpush1.msra.mxu0 %v622
        %886 = vmatprep.subr.mxu0 0.0
        %887 = vmatpush1.msra.mxu0 %v627
        %888 = vmatprep.subr.mxu0 0.0
        %889 = vmatpush1.msra.mxu0 %v632
        %890 = vmatprep.subr.mxu0 0.0
        %891 = vmatpush1.msra.mxu0 0.0
        %892 = vmatprep.subr.mxu0 0.0
        %893 = vmatpush1.msra.mxu0 0.0
        %894 = vmatprep.subr.mxu0 0.0
        %895 = vmatpush1.msra.mxu0 0.0
        %896 = vmatprep.subr.mxu0 0.0
        %897 = vmatpush1.msra.mxu0 0.0
        %898 = vmatprep.subr.mxu0 0.0
        %899 = vmatpush1.msra.mxu0 0.0
        %900 = vmatprep.subr.mxu0 0.0
        %901 = vmatpush1.msra.mxu0 0.0
        %902 = vmatprep.subr.mxu0 0.0
        %903 = vmatpush1.msra.mxu0 0.0
        %904 = vmatprep.subr.mxu0 0.0
        %905 = vmatpush1.msra.mxu0 0.0
        %906 = vmatprep.subr.mxu0 0.0
        %907 = vmatpush1.msra.mxu0 0.0
        %908 = vmatprep.subr.mxu0 0.0
        %909 = vmatpush1.msra.mxu0 0.0
        %910 = vmatprep.subr.mxu0 0.0
        %911 = vmatpush1.msra.mxu0 0.0
        %912 = vmatprep.subr.mxu0 0.0
        %913 = vmatpush1.msra.mxu0 0.0
        %914 = vmatprep.subr.mxu0 0.0
        %915 = vmatpush1.msra.mxu0 0.0
        %916 = vmatprep.subr.mxu0 0.0
        %917 = vmatpush1.msra.mxu0 0.0
        %918 = vmatprep.subr.mxu0 0.0
        %919 = vmatpush1.msra.mxu0 0.0
        %920 = vmatprep.subr.mxu0 0.0
        %921 = vmatpush1.msra.mxu0 0.0
        %922 = vmatprep.subr.mxu0 0.0
        %923 = vmatpush1.msra.mxu0 0.0
        %924 = vmatprep.subr.mxu0 0.0
        %925 = vmatpush1.msra.mxu0 0.0
        %926 = vmatprep.subr.mxu0 0.0
        %927 = vmatpush1.msra.mxu0 0.0
        %928 = vmatprep.subr.mxu0 0.0
        %929 = vmatpush1.msra.mxu0 0.0
        %930 = vmatprep.subr.mxu0 0.0
        %931 = vmatpush1.msra.mxu0 0.0
        %932 = vmatprep.subr.mxu0 0.0
        %933 = vmatpush1.msra.mxu0 0.0
        %934 = vmatprep.subr.mxu0 0.0
        %935 = vmatpush1.msra.mxu0 0.0
        %936 = vmatprep.subr.mxu0 0.0
        %937 = vmatpush1.msra.mxu0 0.0
        %938 = vmatprep.subr.mxu0 0.0
        %939 = vmatpush1.msra.mxu0 0.0
        %940 = vmatprep.subr.mxu0 0.0
        %941 = vmatpush1.msra.mxu0 0.0
        %942 = vmatprep.subr.mxu0 0.0
        %943 = vmatpush1.msra.mxu0 0.0
        %944 = vmatprep.mubr.f32.mxu0 0.0
        %945 = vmatmul.mubr.f32.gmra.mrb[0].mxu0 %v878
        %v946 = vpop.f32.mrb[0].mxu0
        %v947 = vadd.f32 0.0, %v946
        %v948 = vpop.f32.mrb[0].mxu0
        %949 = vdwg.mxu0
        %v950 = vld [vmem:[%s1] sm:$0xff]
        %v951 = vld [vmem:[%s1 + $0x8] sm:$0xff]
        %v952 = vld [vmem:[%s1 + $0x10] sm:$0xff]
        %v953 = vld [vmem:[%s1 + $0x18] sm:$0xff]
        %v954 = vld [vmem:[%s1 + $0x20] sm:$0xff]
        %v955 = vld [vmem:[%s8] sm:$0xf]
        %vm956 = vcmask 39936
        %v958 = vsel %vm956, %v950, 0
        %v961 = vsel %vm956, %v951, 0
        %v964 = vsel %vm956, %v952, 0
        %v967 = vsel %vm956, %v953, 0
        %v970 = vsel %vm956, %v954, 0
        %vm972 = vcmask 1044480
        %v974 = vsel %vm972, %v947, 0
        %976 = vmatprep.subr.mxu0 0.0
        %977 = vmatpush1.msra.mxu0 %v974
        %978 = vmatprep.subr.mxu0 0.0
        %979 = vmatpush1.msra.mxu0 0.0
        %980 = vmatprep.subr.mxu0 0.0
        %981 = vmatpush1.msra.mxu0 0.0
        %982 = vmatprep.subr.mxu0 0.0
        %983 = vmatpush1.msra.mxu0 0.0
        %984 = vmatprep.subr.mxu0 0.0
        %985 = vmatpush1.msra.mxu0 0.0
        %986 = vmatprep.subr.mxu0 0.0
        %987 = vmatpush1.msra.mxu0 0.0
        %988 = vmatprep.subr.mxu0 0.0
        %989 = vmatpush1.msra.mxu0 0.0
        %990 = vmatprep.subr.mxu0 0.0
        %991 = vmatpush1.msra.mxu0 0.0
        %992 = vmatprep.subr.mxu0 0.0
        %993 = vmatpush1.msra.mxu0 0.0
        %994 = vmatprep.subr.mxu0 0.0
        %995 = vmatpush1.msra.mxu0 0.0
        %996 = vmatprep.subr.mxu0 0.0
        %997 = vmatpush1.msra.mxu0 0.0
        %998 = vmatprep.subr.mxu0 0.0
        %999 = vmatpush1.msra.mxu0 0.0
        %1000 = vmatprep.subr.mxu0 0.0
        %1001 = vmatpush1.msra.mxu0 0.0
        %1002 = vmatprep.subr.mxu0 0.0
        %1003 = vmatpush1.msra.mxu0 0.0
        %1004 = vmatprep.subr.mxu0 0.0
        %1005 = vmatpush1.msra.mxu0 0.0
        %1006 = vmatprep.subr.mxu0 0.0
        %1007 = vmatpush1.msra.mxu0 0.0
        %1008 = vmatprep.subr.mxu0 0.0
        %1009 = vmatpush1.msra.mxu0 0.0
        %1010 = vmatprep.subr.mxu0 0.0
        %1011 = vmatpush1.msra.mxu0 0.0
        %1012 = vmatprep.subr.mxu0 0.0
        %1013 = vmatpush1.msra.mxu0 0.0
        %1014 = vmatprep.subr.mxu0 0.0
        %1015 = vmatpush1.msra.mxu0 0.0
        %1016 = vmatprep.subr.mxu0 0.0
        %1017 = vmatpush1.msra.mxu0 0.0
        %1018 = vmatprep.subr.mxu0 0.0
        %1019 = vmatpush1.msra.mxu0 0.0
        %1020 = vmatprep.subr.mxu0 0.0
        %1021 = vmatpush1.msra.mxu0 0.0
        %1022 = vmatprep.subr.mxu0 0.0
        %1023 = vmatpush1.msra.mxu0 0.0
        %1024 = vmatprep.subr.mxu0 0.0
        %1025 = vmatpush1.msra.mxu0 0.0
        %1026 = vmatprep.subr.mxu0 0.0
        %1027 = vmatpush1.msra.mxu0 0.0
        %1028 = vmatprep.subr.mxu0 0.0
        %1029 = vmatpush1.msra.mxu0 0.0
        %1030 = vmatprep.subr.mxu0 0.0
        %1031 = vmatpush1.msra.mxu0 0.0
        %1032 = vmatprep.subr.mxu0 0.0
        %1033 = vmatpush1.msra.mxu0 0.0
        %1034 = vmatprep.subr.mxu0 0.0
        %1035 = vmatpush1.msra.mxu0 0.0
        %1036 = vmatprep.subr.mxu0 0.0
        %1037 = vmatpush1.msra.mxu0 0.0
        %1038 = vmatprep.subr.mxu0 0.0
        %1039 = vmatpush1.msra.mxu0 0.0
        %1040 = vmatprep.mubr.f32.mxu0 0.0
        %1041 = vmatmul.mubr.f32.gmra.mrb[0].mxu0 %v958
        %v1042 = vpop.f32.mrb[0].mxu0
        %v1043 = vadd.f32 %v586, %v1042
        %v1044 = vpop.f32.mrb[0].mxu0
        %1045 = vmatprep.mubr.f32.mxu0 0.0
        %1046 = vmatmul.mubr.f32.gmra.mrb[0].mxu0 %v961
        %v1047 = vpop.f32.mrb[0].mxu0
        %v1048 = vadd.f32 %v591, %v1047
        %v1049 = vpop.f32.mrb[0].mxu0
        %1050 = vmatprep.mubr.f32.mxu0 0.0
        %1051 = vmatmul.mubr.f32.gmra.mrb[0].mxu0 %v964
        %v1052 = vpop.f32.mrb[0].mxu0
        %v1053 = vadd.f32 %v596, %v1052
        %v1054 = vpop.f32.mrb[0].mxu0
        %1055 = vmatprep.mubr.f32.mxu0 0.0
        %1056 = vmatmul.mubr.f32.gmra.mrb[0].mxu0 %v967
        %v1057 = vpop.f32.mrb[0].mxu0
        %v1058 = vadd.f32 %v601, %v1057
        %v1059 = vpop.f32.mrb[0].mxu0
        %1060 = vmatprep.mubr.f32.mxu0 0.0
        %1061 = vmatmul.mubr.f32.gmra.mrb[0].mxu0 %v970
        %v1062 = vpop.f32.mrb[0].mxu0
        %v1063 = vadd.f32 %v606, %v1062
        %v1064 = vpop.f32.mrb[0].mxu0
        %1065 = vdwg.mxu0
        %1066 = vadd.xlane.f32.xlu0 %v1043
        %v1067 = vpop.xlane.xlu0 %1066
        %1068 = vadd.xlane.f32.xlu0 %v1048
        %v1069 = vpop.xlane.xlu0 %1068
        %1070 = vadd.xlane.f32.xlu0 %v1053
        %v1071 = vpop.xlane.xlu0 %1070
        %1072 = vadd.xlane.f32.xlu0 %v1058
        %v1073 = vpop.xlane.xlu0 %1072
        %1074 = vadd.xlane.f32.xlu0 %v1063
        %v1075 = vpop.xlane.xlu0 %1074
        %v1076 = vrcp.pop 128.0
        %v1077 = vmul.f32 %v1067, %v1076
        %v1078 = vmul.f32 %v1069, %v1076
        %v1079 = vmul.f32 %v1071, %v1076
        %v1080 = vmul.f32 %v1073, %v1076
        %v1081 = vmul.f32 %v1075, %v1076
        %v1082 = vsub.f32 %v1043, %v1077
        %v1083 = vsub.f32 %v1048, %v1078
        %v1084 = vsub.f32 %v1053, %v1079
        %v1085 = vsub.f32 %v1058, %v1080
        %v1086 = vsub.f32 %v1063, %v1081
        %v1087 = vmul.f32 %v1082, %v1082
        %v1088 = vmul.f32 %v1083, %v1083
        %v1089 = vmul.f32 %v1084, %v1084
        %v1090 = vmul.f32 %v1085, %v1085
        %v1091 = vmul.f32 %v1086, %v1086
        %1092 = vadd.xlane.f32.xlu0 %v1087
        %v1093 = vpop.xlane.xlu0 %1092
        %1094 = vadd.xlane.f32.xlu0 %v1088
        %v1095 = vpop.xlane.xlu0 %1094
        %1096 = vadd.xlane.f32.xlu0 %v1089
        %v1097 = vpop.xlane.xlu0 %1096
        %1098 = vadd.xlane.f32.xlu0 %v1090
        %v1099 = vpop.xlane.xlu0 %1098
        %1100 = vadd.xlane.f32.xlu0 %v1091
        %v1101 = vpop.xlane.xlu0 %1100
        %v1102 = vmul.f32 %v1093, %v1076
        %v1103 = vmul.f32 %v1095, %v1076
        %v1104 = vmul.f32 %v1097, %v1076
        %v1105 = vmul.f32 %v1099, %v1076
        %v1106 = vmul.f32 %v1101, %v1076
        %v1107 = vadd.f32 %v1102, 1e-06
        %v1108 = vadd.f32 %v1103, 1e-06
        %v1109 = vadd.f32 %v1104, 1e-06
        %v1110 = vadd.f32 %v1105, 1e-06
        %v1111 = vadd.f32 %v1106, 1e-06
        %v1112 = vrsqrt.pop %v1107
        %v1113 = vrsqrt.pop %v1108
        %v1114 = vrsqrt.pop %v1109
        %v1115 = vrsqrt.pop %v1110
        %v1116 = vrsqrt.pop %v1111
        %v1117 = vmul.f32 %v1082, %v1112
        %v1118 = vmul.f32 %v1083, %v1113
        %v1119 = vmul.f32 %v1084, %v1114
        %v1120 = vmul.f32 %v1085, %v1115
        %v1121 = vmul.f32 %v1086, %v1116
        %v1122 = vlaneseq
        %v1123 = vshrl.u32 %v1122, 7
        %v1124 = vsub.s32 0, %v1123
        %v1125 = vrot.slane %v955, %v1124
        %v1126 = vmul.f32 %v1117, %v1125
        %v1127 = vmul.f32 %v1118, %v1125
        %v1128 = vmul.f32 %v1119, %v1125
        %v1129 = vmul.f32 %v1120, %v1125
        %v1130 = vmul.f32 %v1121, %v1125
        %v1131 = vlaneseq
        %v1132 = vshrl.u32 %v1131, 7
        %v1133 = vsub.s32 1, %v1132
        %v1134 = vrot.slane %v955, %v1133
        %v1135 = vadd.f32 %v1126, %v1134
        %v1136 = vadd.f32 %v1127, %v1134
        %v1137 = vadd.f32 %v1128, %v1134
        %v1138 = vadd.f32 %v1129, %v1134
        %v1139 = vadd.f32 %v1130, %v1134
        %v1140 = vld [vmem:[#allocation11] sm:$0xff]
        %v1141 = vld [vmem:[#allocation11 + $0x8] sm:$0xff]
        %v1142 = vld [vmem:[#allocation11 + $0x10] sm:$0xff]
        %v1143 = vld [vmem:[#allocation11 + $0x18] sm:$0xff]
        %v1144 = vld [vmem:[#allocation11 + $0x20] sm:$0xff]
        %v1145 = vld [vmem:[#allocation11 + $0x28] sm:$0xff]
        %v1146 = vld [vmem:[#allocation11 + $0x30] sm:$0xff]
        %v1147 = vld [vmem:[#allocation11 + $0x38] sm:$0xff]
        %v1148 = vld [vmem:[#allocation11 + $0x40] sm:$0xff]
        %v1149 = vld [vmem:[#allocation11 + $0x48] sm:$0xff]
        %v1150 = vld [vmem:[#allocation11 + $0x50] sm:$0xff]
        %v1151 = vld [vmem:[#allocation11 + $0x58] sm:$0xff]
        %v1152 = vld [vmem:[#allocation11 + $0x60] sm:$0xff]
        %v1153 = vld [vmem:[#allocation11 + $0x68] sm:$0xff]
        %v1154 = vld [vmem:[#allocation11 + $0x70] sm:$0xff]
        %v1155 = vld [vmem:[#allocation11 + $0x78] sm:$0xff]
        %1156 = vmatprep.subr.mxu0 0.0
        %1157 = vmatpush1.msra.mxu0 %v1140
        %1158 = vmatprep.subr.mxu0 0.0
        %1159 = vmatpush1.msra.mxu0 %v1141
        %1160 = vmatprep.subr.mxu0 0.0
        %1161 = vmatpush1.msra.mxu0 %v1142
        %1162 = vmatprep.subr.mxu0 0.0
        %1163 = vmatpush1.msra.mxu0 %v1143
        %1164 = vmatprep.subr.mxu0 0.0
        %1165 = vmatpush1.msra.mxu0 %v1144
        %1166 = vmatprep.subr.mxu0 0.0
        %1167 = vmatpush1.msra.mxu0 %v1145
        %1168 = vmatprep.subr.mxu0 0.0
        %1169 = vmatpush1.msra.mxu0 %v1146
        %1170 = vmatprep.subr.mxu0 0.0
        %1171 = vmatpush1.msra.mxu0 %v1147
        %1172 = vmatprep.subr.mxu0 0.0
        %1173 = vmatpush1.msra.mxu0 %v1148
        %1174 = vmatprep.subr.mxu0 0.0
        %1175 = vmatpush1.msra.mxu0 %v1149
        %1176 = vmatprep.subr.mxu0 0.0
        %1177 = vmatpush1.msra.mxu0 %v1150
        %1178 = vmatprep.subr.mxu0 0.0
        %1179 = vmatpush1.msra.mxu0 %v1151
        %1180 = vmatprep.subr.mxu0 0.0
        %1181 = vmatpush1.msra.mxu0 %v1152
        %1182 = vmatprep.subr.mxu0 0.0
        %1183 = vmatpush1.msra.mxu0 %v1153
        %1184 = vmatprep.subr.mxu0 0.0
        %1185 = vmatpush1.msra.mxu0 %v1154
        %1186 = vmatprep.subr.mxu0 0.0
        %1187 = vmatpush1.msra.mxu0 %v1155
        %1188 = vmatprep.subr.mxu0 0.0
        %1189 = vmatpush1.msra.mxu0 0.0
        %1190 = vmatprep.subr.mxu0 0.0
        %1191 = vmatpush1.msra.mxu0 0.0
        %1192 = vmatprep.subr.mxu0 0.0
        %1193 = vmatpush1.msra.mxu0 0.0
        %1194 = vmatprep.subr.mxu0 0.0
        %1195 = vmatpush1.msra.mxu0 0.0
        %1196 = vmatprep.subr.mxu0 0.0
        %1197 = vmatpush1.msra.mxu0 0.0
        %1198 = vmatprep.subr.mxu0 0.0
        %1199 = vmatpush1.msra.mxu0 0.0
        %1200 = vmatprep.subr.mxu0 0.0
        %1201 = vmatpush1.msra.mxu0 0.0
        %1202 = vmatprep.subr.mxu0 0.0
        %1203 = vmatpush1.msra.mxu0 0.0
        %1204 = vmatprep.subr.mxu0 0.0
        %1205 = vmatpush1.msra.mxu0 0.0
        %1206 = vmatprep.subr.mxu0 0.0
        %1207 = vmatpush1.msra.mxu0 0.0
        %1208 = vmatprep.subr.mxu0 0.0
        %1209 = vmatpush1.msra.mxu0 0.0
        %1210 = vmatprep.subr.mxu0 0.0
        %1211 = vmatpush1.msra.mxu0 0.0
        %1212 = vmatprep.subr.mxu0 0.0
        %1213 = vmatpush1.msra.mxu0 0.0
        %1214 = vmatprep.subr.mxu0 0.0
        %1215 = vmatpush1.msra.mxu0 0.0
        %1216 = vmatprep.subr.mxu0 0.0
        %1217 = vmatpush1.msra.mxu0 0.0
        %1218 = vmatprep.subr.mxu0 0.0
        %1219 = vmatpush1.msra.mxu0 0.0
        %1220 = vmatprep.mubr.f32.mxu0 0.0
        %1221 = vmatmul.mubr.f32.gmra.mrb[0].mxu0 %v1135
        %v1222 = vpop.f32.mrb[0].mxu0
        %v1223 = vadd.f32 0.0, %v1222
        %v1224 = vpop.f32.mrb[0].mxu0
        %1225 = vmatprep.mubr.f32.mxu0 0.0
        %1226 = vmatmul.mubr.f32.gmra.mrb[0].mxu0 %v1136
        %v1227 = vpop.f32.mrb[0].mxu0
        %v1228 = vadd.f32 0.0, %v1227
        %v1229 = vpop.f32.mrb[0].mxu0
        %1230 = vmatprep.mubr.f32.mxu0 0.0
        %1231 = vmatmul.mubr.f32.gmra.mrb[0].mxu0 %v1137
        %v1232 = vpop.f32.mrb[0].mxu0
        %v1233 = vadd.f32 0.0, %v1232
        %v1234 = vpop.f32.mrb[0].mxu0
        %1235 = vmatprep.mubr.f32.mxu0 0.0
        %1236 = vmatmul.mubr.f32.gmra.mrb[0].mxu0 %v1138
        %v1237 = vpop.f32.mrb[0].mxu0
        %v1238 = vadd.f32 0.0, %v1237
        %v1239 = vpop.f32.mrb[0].mxu0
        %1240 = vmatprep.mubr.f32.mxu0 0.0
        %1241 = vmatmul.mubr.f32.gmra.mrb[0].mxu0 %v1139
        %v1242 = vpop.f32.mrb[0].mxu0
        %v1243 = vadd.f32 0.0, %v1242
        %v1244 = vpop.f32.mrb[0].mxu0
        %1245 = vdwg.mxu0
        %vm1246 = vcmp.ge.f32.partialorder %v1223, 0.0
        %vm1247 = vcmp.ge.f32.partialorder %v1228, 0.0
        %vm1248 = vcmp.ge.f32.partialorder %v1233, 0.0
        %vm1249 = vcmp.ge.f32.partialorder %v1238, 0.0
        %vm1250 = vcmp.ge.f32.partialorder %v1243, 0.0
        %v1251 = vmul.f32 %v1223, 0.1
        %v1252 = vmul.f32 %v1228, 0.1
        %v1253 = vmul.f32 %v1233, 0.1
        %v1254 = vmul.f32 %v1238, 0.1
        %v1255 = vmul.f32 %v1243, 0.1
        %v1256 = vsel %vm1246, %v1223, %v1251
        %v1257 = vsel %vm1247, %v1228, %v1252
        %v1258 = vsel %vm1248, %v1233, %v1253
        %v1259 = vsel %vm1249, %v1238, %v1254
        %v1260 = vsel %vm1250, %v1243, %v1255
        %v1261 = vadd.f32 %v1256, %v1135
        %v1262 = vadd.f32 %v1257, %v1136
        %v1263 = vadd.f32 %v1258, %v1137
        %v1264 = vadd.f32 %v1259, %v1138
        %v1265 = vadd.f32 %v1260, %v1139
        %1266 = vadd.xlane.f32.xlu0 %v1261
        %v1267 = vpop.xlane.xlu0 %1266
        %1268 = vadd.xlane.f32.xlu0 %v1262
        %v1269 = vpop.xlane.xlu0 %1268
        %1270 = vadd.xlane.f32.xlu0 %v1263
        %v1271 = vpop.xlane.xlu0 %1270
        %1272 = vadd.xlane.f32.xlu0 %v1264
        %v1273 = vpop.xlane.xlu0 %1272
        %1274 = vadd.xlane.f32.xlu0 %v1265
        %v1275 = vpop.xlane.xlu0 %1274
        %v1276 = vmul.f32 %v1267, %v1076
        %v1277 = vmul.f32 %v1269, %v1076
        %v1278 = vmul.f32 %v1271, %v1076
        %v1279 = vmul.f32 %v1273, %v1076
        %v1280 = vmul.f32 %v1275, %v1076
        %v1281 = vsub.f32 %v1261, %v1276
        %v1282 = vsub.f32 %v1262, %v1277
        %v1283 = vsub.f32 %v1263, %v1278
        %v1284 = vsub.f32 %v1264, %v1279
        %v1285 = vsub.f32 %v1265, %v1280
        %v1286 = vmul.f32 %v1281, %v1281
        %v1287 = vmul.f32 %v1282, %v1282
        %v1288 = vmul.f32 %v1283, %v1283
        %v1289 = vmul.f32 %v1284, %v1284
        %v1290 = vmul.f32 %v1285, %v1285
        %1291 = vadd.xlane.f32.xlu0 %v1286
        %v1292 = vpop.xlane.xlu0 %1291
        %1293 = vadd.xlane.f32.xlu0 %v1287
        %v1294 = vpop.xlane.xlu0 %1293
        %1295 = vadd.xlane.f32.xlu0 %v1288
        %v1296 = vpop.xlane.xlu0 %1295
        %1297 = vadd.xlane.f32.xlu0 %v1289
        %v1298 = vpop.xlane.xlu0 %1297
        %1299 = vadd.xlane.f32.xlu0 %v1290
        %v1300 = vpop.xlane.xlu0 %1299
        %v1301 = vmul.f32 %v1292, %v1076
        %v1302 = vmul.f32 %v1294, %v1076
        %v1303 = vmul.f32 %v1296, %v1076
        %v1304 = vmul.f32 %v1298, %v1076
        %v1305 = vmul.f32 %v1300, %v1076
        %v1306 = vadd.f32 %v1301, 1e-06
        %v1307 = vadd.f32 %v1302, 1e-06
        %v1308 = vadd.f32 %v1303, 1e-06
        %v1309 = vadd.f32 %v1304, 1e-06
        %v1310 = vadd.f32 %v1305, 1e-06
        %v1311 = vrsqrt.pop %v1306
        %v1312 = vrsqrt.pop %v1307
        %v1313 = vrsqrt.pop %v1308
        %v1314 = vrsqrt.pop %v1309
        %v1315 = vrsqrt.pop %v1310
        %v1316 = vmul.f32 %v1281, %v1311
        %v1317 = vmul.f32 %v1282, %v1312
        %v1318 = vmul.f32 %v1283, %v1313
        %v1319 = vmul.f32 %v1284, %v1314
        %v1320 = vmul.f32 %v1285, %v1315
        %v1321 = vlaneseq
        %v1322 = vshrl.u32 %v1321, 7
        %v1323 = vsub.s32 2, %v1322
        %v1324 = vrot.slane %v955, %v1323
        %v1325 = vmul.f32 %v1316, %v1324
        %v1326 = vmul.f32 %v1317, %v1324
        %v1327 = vmul.f32 %v1318, %v1324
        %v1328 = vmul.f32 %v1319, %v1324
        %v1329 = vmul.f32 %v1320, %v1324
        %v1330 = vlaneseq
        %v1331 = vshrl.u32 %v1330, 7
        %v1332 = vsub.s32 3, %v1331
        %v1333 = vrot.slane %v955, %v1332
        %v1334 = vadd.f32 %v1325, %v1333
        %v1335 = vadd.f32 %v1326, %v1333
        %v1336 = vadd.f32 %v1327, %v1333
        %v1337 = vadd.f32 %v1328, %v1333
        %v1338 = vadd.f32 %v1329, %v1333
        %1339 = vst [vmem:[%s471] sm:$0xff] %v1334
        %1340 = vst [vmem:[%s471 + $0x8] sm:$0xff] %v1335
        %1341 = vst [vmem:[%s471 + $0x10] sm:$0xff] %v1336
        %1342 = vst [vmem:[%s471 + $0x18] sm:$0xff] %v1337
        %1343 = vst [vmem:[%s471 + $0x20] sm:$0xff] %v1338
        %s1344 = sand.u32 %s243, 1
        %s1345 = scalar_lea.sflag [#allocation4], %s1344
        %s1346 = sand.u32 %s243, 1
        %s1347 = smul.addr %s1346, 40
        %s1348 = scalar_lea.vmem [#allocation13], %s1347
        // Predicated region
        $region81: #{tpu_custom_call.1} parent=55 // pred_check
          %p1349 = pneg %p253
        $region82: #{tpu_custom_call.1} parent=55 // pred_check_branch
          %1351 = sbr.rel (%p1349) target = $region84
        $region83: #{tpu_custom_call.1} parent=55 // pred_region
          %s1353 = ssub.s32 640, 640
          %1354 = vsyncadd %s1345, %s1353
          %s1355 = smul.addr %s31, 5
          %s1356 = smul.addr %s1355, 128
          %s1357 = scalar_lea.hbm %s9, %s1356
          %s1358 = sshll.u32 %s1348, 4
          %s1359 = int_to_ptr.vmem [resolvable:$true] %s1358
          %1364 = dma.vmem_to_hbm [thread:$0]  %s1359, 640, %s1357, %s1345, 128, 128, 8
        $region84: #{tpu_custom_call.1} parent=55 // pred_fallthru
          _
      $region56: #{tpu_custom_call.1} parent=5 // pred_fallthru
        _
      %p1365 = scmp.le.s32.totalorder 2, %s26
      // Predicated region
      $region85: #{tpu_custom_call.1} parent=5 // pred_check
        %p1366 = pneg %p1365
      $region86: #{tpu_custom_call.1} parent=5 // pred_check_branch
        %1368 = sbr.rel (%p1366) target = $region88
      $region87: #{tpu_custom_call.1} parent=5 // pred_region
        %s1369 = ssub.s32 %s26, 2
        // Predicated region
        $region89: #{tpu_custom_call.1} parent=87 // pred_check
          %p1370 = pneg %p259
        $region90: #{tpu_custom_call.1} parent=87 // pred_check_branch
          %1372 = sbr.rel (%p1370) target = $region92
        $region91: #{tpu_custom_call.1} parent=87 // pred_region
          %s1373 = sand.u32 %s244, 1
          %s1374 = scalar_lea.sflag [#allocation4], %s1373
          %s1375 = sand.u32 %s244, 1
          %s1376 = smul.addr %s1375, 40
          %s1377 = scalar_lea.vmem [#allocation13], %s1376
          %1378 = dma.done %s1374, 640
        $region92: #{tpu_custom_call.1} parent=87 // pred_fallthru
          _
      $region88: #{tpu_custom_call.1} parent=5 // pred_fallthru
        _
    $region6: #{tpu_custom_call.1} parent=1 // loop_footer
      %s30 = sadd.s32 1, %s26
    $region7: #{tpu_custom_call.1} parent=1 // loop_footer_branch
      %25 = sbr.rel target = $region3
    $region8: #{tpu_custom_call.1} parent=1 // loop_exit
      _
    %1379 = vsyncpa [#allocation3], 1
    %s1380 = scalar_lea.sflag [#allocation3], 1
    %1381 = vsyncpa %s1380, 1
    %1382 = vsyncpa [#allocation6], 1
    %s1383 = scalar_lea.sflag [#allocation6], 1
    %1384 = vsyncpa %s1383, 1
    %1385 = vsyncpa [#allocation9], 1
    %1386 = vsyncpa [#allocation12], 1
    %1387 = vsyncpa [#allocation4], 1
    %s1388 = scalar_lea.sflag [#allocation4], 1
    %1389 = vsyncpa %s1388, 1

</llo_original>
